<compile_context>
chip_gen: v7x
topology: tpu7x:2x2x1
jax: 0.10.0
libtpu: 0.0.40
codegen_flags: <defaults>
</compile_context>

<pallas_src>
import jax
import jax.numpy as jnp
from jax.experimental import pallas as pl
from jax.experimental.pallas import tpu as pltpu

INPUT_SIZE = 11
HIDDEN = 70
HP = 128                     # hidden padded to one full lane block
N_ACTIONS = 18               # len(self.action_list)
FC_IN = HIDDEN + N_ACTIONS   # 88
G4 = 4 * HP                  # 512: packed gate width, gate order (i, f, o, g)
BB = 8                       # sequences per grid step (one sublane tile)


def rl_kernel(x_ref, wih_ref, whh_ref, b_ref, wfc_ref, aconst_ref, out_ref, gx_ref):
    """Forward pass for one batch block of BB sequences.

    x_ref      : (T*BB, 11)  f32 VMEM  inputs, row = t*BB + b_local (timestep-major in block)
    wih_ref    : (11, 512)   f32 VMEM  packed input->hidden weights (i,f,o,g), lane-padded
    whh_ref    : (128, 512)  f32 VMEM  packed hidden->hidden weights, row- and lane-padded
    b_ref      : (1, 512)    f32 VMEM  b_ih + b_hh, packed / padded to match
    wfc_ref    : (1, 128)    f32 VMEM  fcn2 weights acting on the hidden part, lane-padded
    aconst_ref : (1, 18)     f32 VMEM  fcn2 action-column weight + bias per candidate action
    out_ref    : (BB, 18)    f32 VMEM  fcn2 output for every (sequence, action) pair
    gx_ref     : (T*BB, 512) f32 VMEM  scratch: hoisted per-timestep gate pre-activations
    """
    tb = x_ref.shape[0]
    T = tb // BB

    # Hoisted input projection: one matmul + bias for every (t, b) pair in the block.
    gx_ref[...] = (jnp.dot(x_ref[...], wih_ref[...], preferred_element_type=jnp.float32)
                   + b_ref[...])

    def step(t, carry):
        h, c = carry                                             # each (BB, HP)
        row = pl.multiple_of(t * BB, BB)
        gates = (jnp.dot(h, whh_ref[...], preferred_element_type=jnp.float32)
                 + gx_ref[pl.ds(row, BB), :])                    # (BB, 4*HP)
        # sigmoid(x) == 0.5*(1 + tanh(0.5*x)): one EUP push per vreg on the serial path.
        sig = 0.5 * (jnp.tanh(0.5 * gates[:, :3 * HP]) + 1.0)    # i | f | o
        i_g = sig[:, 0:HP]
        f_g = sig[:, HP:2 * HP]
        o_g = sig[:, 2 * HP:3 * HP]
        g_g = jnp.tanh(gates[:, 3 * HP:])
        c_new = f_g * c + i_g * g_g
        h_new = o_g * jnp.tanh(c_new)
        return h_new, c_new

    h0 = jnp.zeros((BB, HP), jnp.float32)
    c0 = jnp.zeros((BB, HP), jnp.float32)
    h, _ = jax.lax.fori_loop(0, T, step, (h0, c0), unroll=True)

    # ReLU + Linear(88 -> 1) for all 18 actions at once: hidden part is a VPU multiply +
    # lane reduce; each action only adds its own fcn2 column weight (+ bias), a (1, 18) vector.
    h_relu = jnp.maximum(h, 0.0)
    hid = jnp.sum(h_relu * wfc_ref[...], axis=-1, keepdims=True)   # (BB, 1)
    out_ref[...] = hid + aconst_ref[...]                           # (BB, 18)


def init_params(key):
    """Deterministic init mimicking torch default uniform(-1/sqrt(fan), 1/sqrt(fan))."""
    k_lstm = 1.0 / jnp.sqrt(jnp.float32(HIDDEN))
    k_fc = 1.0 / jnp.sqrt(jnp.float32(FC_IN))
    ks = jax.random.split(key, 6)
    w_ih = jax.random.uniform(ks[0], (4 * HIDDEN, INPUT_SIZE), jnp.float32, -k_lstm, k_lstm)
    w_hh = jax.random.uniform(ks[1], (4 * HIDDEN, HIDDEN), jnp.float32, -k_lstm, k_lstm)
    b_ih = jax.random.uniform(ks[2], (4 * HIDDEN,), jnp.float32, -k_lstm, k_lstm)
    b_hh = jax.random.uniform(ks[3], (4 * HIDDEN,), jnp.float32, -k_lstm, k_lstm)
    w_fc = jax.random.uniform(ks[4], (1, FC_IN), jnp.float32, -k_fc, k_fc)
    b_fc = jax.random.uniform(ks[5], (1,), jnp.float32, -k_fc, k_fc)
    return dict(w_ih=w_ih, w_hh=w_hh, b_ih=b_ih, b_hh=b_hh, w_fc=w_fc, b_fc=b_fc)


def _pack_gate_weights(w, in_dim):
    """(4*H, in_dim) torch layout (gate order i,f,g,o) -> (in_dim, 4*HP), gate order (i,f,o,g)."""
    w4 = w.reshape(4, HIDDEN, in_dim)[jnp.array([0, 1, 3, 2])]   # reorder gates to i,f,o,g
    wt = jnp.transpose(w4, (0, 2, 1))                            # (4, in_dim, H)
    wt = jnp.pad(wt, ((0, 0), (0, 0), (0, HP - HIDDEN)))         # (4, in_dim, HP)
    return jnp.transpose(wt, (1, 0, 2)).reshape(in_dim, G4)      # (in_dim, 4*HP)


def pack_params(params):
    """One-time weight packing (do at parameter-load time, never per forward call)."""
    wih = _pack_gate_weights(params["w_ih"], INPUT_SIZE)                       # (11, 512)
    whh = jnp.pad(_pack_gate_weights(params["w_hh"], HIDDEN),
                  ((0, HP - HIDDEN), (0, 0)))                                  # (128, 512)
    b4 = (params["b_ih"] + params["b_hh"]).reshape(4, HIDDEN)[jnp.array([0, 1, 3, 2])]
    b = jnp.pad(b4, ((0, 0), (0, HP - HIDDEN))).reshape(1, G4)                 # (1, 512)
    wfc_h = jnp.pad(params["w_fc"][:, :HIDDEN], ((0, 0), (0, HP - HIDDEN)))    # (1, 128)
    aconst = (params["w_fc"][:, HIDDEN:] + params["b_fc"]).reshape(1, N_ACTIONS)  # (1, 18)
    return dict(wih=wih, whh=whh, b=b, wfc_h=wfc_h, aconst=aconst)


@jax.jit
def rl_forward_all_actions(x, packed):
    """x: (B, T, 11) -> (B, 18): fcn2 output for every sequence and every candidate action."""
    B, T, _ = x.shape
    Bp = ((B + BB - 1) // BB) * BB
    nb = Bp // BB
    x = jnp.pad(x.astype(jnp.float32), ((0, Bp - B), (0, 0), (0, 0)))
    # (Bp, T, 11) -> (nb, T*BB, 11): row within a block = t*BB + b_local (matches the kernel).
    x_blk = (x.reshape(nb, BB, T, INPUT_SIZE)
               .transpose(0, 2, 1, 3)
               .reshape(nb, T * BB, INPUT_SIZE))
    out = pl.pallas_call(
        rl_kernel,
        out_shape=jax.ShapeDtypeStruct((Bp, N_ACTIONS), jnp.float32),
        grid=(nb,),
        in_specs=[
            pl.BlockSpec((None, T * BB, INPUT_SIZE), lambda i: (i, 0, 0)),
            pl.BlockSpec((INPUT_SIZE, G4), lambda i: (0, 0)),
            pl.BlockSpec((HP, G4), lambda i: (0, 0)),
            pl.BlockSpec((1, G4), lambda i: (0, 0)),
            pl.BlockSpec((1, HP), lambda i: (0, 0)),
            pl.BlockSpec((1, N_ACTIONS), lambda i: (0, 0)),
        ],
        out_specs=pl.BlockSpec((BB, N_ACTIONS), lambda i: (i, 0)),
        scratch_shapes=[pltpu.VMEM((T * BB, G4), jnp.float32)],
        compiler_params=pltpu.CompilerParams(dimension_semantics=("parallel",)),
    )(x_blk, packed["wih"], packed["whh"], packed["b"], packed["wfc_h"], packed["aconst"])
    return out[:B]


def rl_forward(x, packed, action_onehot):
    """Matches RLModel.forward: x (T, 11) f32, action one-hot (18,) f32 -> (1,) f32."""
    q = rl_forward_all_actions(x[None, ...], packed)      # (1, 18)
    return q @ action_onehot.astype(jnp.float32)          # (1,)


# ------------------------- pure-JAX reference (torch.nn.LSTM semantics) -------------------------

def _lstm_ref_hidden(x, params):
    wih = params["w_ih"].reshape(4, HIDDEN, INPUT_SIZE)
    whh = params["w_hh"].reshape(4, HIDDEN, HIDDEN)
    b = (params["b_ih"] + params["b_hh"]).reshape(4, HIDDEN)

    def step(carry, x_t):
        h, c = carry
        gates = jnp.einsum("gij,j->gi", wih, x_t) + jnp.einsum("gij,j->gi", whh, h) + b
        i, f, g, o = (jax.nn.sigmoid(gates[0]), jax.nn.sigmoid(gates[1]),
                      jnp.tanh(gates[2]), jax.nn.sigmoid(gates[3]))
        c_new = f * c + i * g
        h_new = o * jnp.tanh(c_new)
        return (h_new, c_new), None

    (h, _), _ = jax.lax.scan(step, (jnp.zeros(HIDDEN), jnp.zeros(HIDDEN)), x)
    return h


def rl_forward_ref(x, params, action_onehot):
    h = jnp.maximum(_lstm_ref_hidden(x, params), 0.0)
    with_actions = jnp.concatenate([h, action_onehot.astype(jnp.float32)])
    return params["w_fc"] @ with_actions + params["b_fc"]


if __name__ == "__main__":
    key = jax.random.PRNGKey(0)
    k_param, k_x = jax.random.split(key)

    params = init_params(k_param)
    packed = pack_params(params)          # one-time packing, hoisted out of the forward path

    B, T = 8, 8
    xs = jax.random.normal(k_x, (B, T, INPUT_SIZE), jnp.float32)

    # Batched kernel: fcn2 output for every sequence and every candidate action.
    q = jax.block_until_ready(rl_forward_all_actions(xs, packed))          # (8, 18)

    # Reference Q-table.
    h_ref = jnp.maximum(jax.vmap(lambda s: _lstm_ref_hidden(s, params))(xs), 0.0)   # (B, 70)
    q_ref = ((h_ref @ params["w_fc"][0, :HIDDEN])[:, None]
             + params["w_fc"][0, HIDDEN:][None, :] + params["b_fc"][0])
    assert q.shape == (B, N_ACTIONS)
    assert jnp.allclose(q, q_ref, atol=1e-4, rtol=1e-4), (q, q_ref)

    # Original-module semantics: one sequence, one given action (identity test on the Python
    # action_list is represented as a one-hot built outside the kernel) -> (1,).
    action_idx = 3
    onehot = jnp.zeros((N_ACTIONS,), jnp.float32).at[action_idx].set(1.0)
    out1 = jax.block_until_ready(rl_forward(xs[0], packed, onehot))
    ref1 = rl_forward_ref(xs[0], params, onehot)
    assert out1.shape == (1,)
    assert jnp.allclose(out1, ref1, atol=1e-4, rtol=1e-4), (out1, ref1)

    print("KERNEL_OK")
</pallas_src>

<mosaic_0001>
module attributes {stable_mosaic.version = 11 : i64} {
  func.func @rl_kernel(%arg0: i32, %arg1: memref<1x64x11xf32, #tpu.memory_space<vmem>>, %arg2: memref<11x512xf32, #tpu.memory_space<vmem>>, %arg3: memref<128x512xf32, #tpu.memory_space<vmem>>, %arg4: memref<1x512xf32, #tpu.memory_space<vmem>>, %arg5: memref<1x128xf32, #tpu.memory_space<vmem>>, %arg6: memref<1x18xf32, #tpu.memory_space<vmem>>, %arg7: memref<8x18xf32, #tpu.memory_space<vmem>>, %arg8: memref<64x512xf32, #tpu.memory_space<vmem>>) attributes {dimension_semantics = [#tpu.dimension_semantics<parallel>], iteration_bounds = array<i64: 1>, scalar_prefetch = 0 : i64, scratch_operands = 1 : i64, tpu.core_type = #tpu.core_type<tc>, window_params = [{transform_indices = @transform_0, window_bounds = array<i64: 1, 64, 11>}, {pipeline_mode = #tpu.pipeline_mode<synchronous>, transform_indices = @transform_1, window_bounds = array<i64: 11, 512>}, {pipeline_mode = #tpu.pipeline_mode<synchronous>, transform_indices = @transform_2, window_bounds = array<i64: 128, 512>}, {pipeline_mode = #tpu.pipeline_mode<synchronous>, transform_indices = @transform_3, window_bounds = array<i64: 1, 512>}, {pipeline_mode = #tpu.pipeline_mode<synchronous>, transform_indices = @transform_4, window_bounds = array<i64: 1, 128>}, {pipeline_mode = #tpu.pipeline_mode<synchronous>, transform_indices = @transform_5, window_bounds = array<i64: 1, 18>}, {transform_indices = @transform_6, window_bounds = array<i64: 8, 18>}]} {
    %c0 = arith.constant 0 : index
    %c0_0 = arith.constant 0 : index
    %c0_1 = arith.constant 0 : index
    %0 = vector.load %arg1[%c0, %c0_0, %c0_1] : memref<1x64x11xf32, #tpu.memory_space<vmem>>, vector<1x64x11xf32>
    %1 = vector.shape_cast %0 : vector<1x64x11xf32> to vector<64x11xf32>
    %c0_2 = arith.constant 0 : index
    %c0_3 = arith.constant 0 : index
    %2 = vector.load %arg2[%c0_2, %c0_3] : memref<11x512xf32, #tpu.memory_space<vmem>>, vector<11x512xf32>
    %cst = arith.constant dense<0.000000e+00> : vector<64x512xf32>
    %3 = tpu.matmul %1, %2, %cst {dimension_numbers = #tpu.dot_dimension_numbers<[1], [0], [0], [1], [0, 0, 1, 1], [], []>} : vector<64x11xf32>, vector<11x512xf32>, vector<64x512xf32> -> vector<64x512xf32>
    %c0_4 = arith.constant 0 : index
    %c0_5 = arith.constant 0 : index
    %4 = vector.load %arg4[%c0_4, %c0_5] : memref<1x512xf32, #tpu.memory_space<vmem>>, vector<1x512xf32>
    %5 = vector.broadcast %4 : vector<1x512xf32> to vector<64x512xf32>
    %6 = arith.addf %3, %5 : vector<64x512xf32>
    %c0_6 = arith.constant 0 : index
    %c0_7 = arith.constant 0 : index
    %7 = vector.load %arg8[%c0_6, %c0_7] : memref<64x512xf32, #tpu.memory_space<vmem>>, vector<64x512xf32>
    tpu.vector_store %arg8[%c0_6, %c0_7], %6 {strides = array<i32>} : memref<64x512xf32, #tpu.memory_space<vmem>>, vector<64x512xf32>,
    %cst_8 = arith.constant 0.000000e+00 : f32
    %8 = vector.broadcast %cst_8 : f32 to vector<8x128xf32>
    %cst_9 = arith.constant 0.000000e+00 : f32
    %9 = vector.broadcast %cst_9 : f32 to vector<8x128xf32>
    %c0_i32 = arith.constant 0 : i32
    %c8_i32 = arith.constant 8 : i32
    %10 = arith.muli %c0_i32, %c8_i32 : i32
    %11 = tpu.assume_multiple %10, 8 : i32
    %c0_10 = arith.constant 0 : index
    %c0_11 = arith.constant 0 : index
    %12 = vector.load %arg3[%c0_10, %c0_11] : memref<128x512xf32, #tpu.memory_space<vmem>>, vector<128x512xf32>
    %cst_12 = arith.constant dense<0.000000e+00> : vector<8x512xf32>
    %13 = tpu.matmul %8, %12, %cst_12 {dimension_numbers = #tpu.dot_dimension_numbers<[1], [0], [0], [1], [0, 0, 1, 1], [], []>} : vector<8x128xf32>, vector<128x512xf32>, vector<8x512xf32> -> vector<8x512xf32>
    %14 = arith.index_cast %11 : i32 to index
    %c0_13 = arith.constant 0 : index
    %15 = vector.load %arg8[%14, %c0_13] : memref<64x512xf32, #tpu.memory_space<vmem>>, vector<8x512xf32>
    %16 = arith.addf %13, %15 : vector<8x512xf32>
    %17 = vector.extract_strided_slice %16 {offsets = [0, 0], sizes = [8, 384], strides = [1, 1]} : vector<8x512xf32> to vector<8x384xf32>
    %cst_14 = arith.constant 5.000000e-01 : f32
    %18 = vector.broadcast %cst_14 : f32 to vector<8x384xf32>
    %19 = arith.mulf %18, %17 : vector<8x384xf32>
    %20 = math.tanh %19 : vector<8x384xf32>
    %cst_15 = arith.constant 1.000000e+00 : f32
    %21 = vector.broadcast %cst_15 : f32 to vector<8x384xf32>
    %22 = arith.addf %20, %21 : vector<8x384xf32>
    %cst_16 = arith.constant 5.000000e-01 : f32
    %23 = vector.broadcast %cst_16 : f32 to vector<8x384xf32>
    %24 = arith.mulf %23, %22 : vector<8x384xf32>
    %25 = vector.extract_strided_slice %24 {offsets = [0, 0], sizes = [8, 128], strides = [1, 1]} : vector<8x384xf32> to vector<8x128xf32>
    %26 = vector.extract_strided_slice %24 {offsets = [0, 128], sizes = [8, 128], strides = [1, 1]} : vector<8x384xf32> to vector<8x128xf32>
    %27 = vector.extract_strided_slice %24 {offsets = [0, 256], sizes = [8, 128], strides = [1, 1]} : vector<8x384xf32> to vector<8x128xf32>
    %28 = vector.extract_strided_slice %16 {offsets = [0, 384], sizes = [8, 128], strides = [1, 1]} : vector<8x512xf32> to vector<8x128xf32>
    %29 = math.tanh %28 : vector<8x128xf32>
    %30 = arith.mulf %26, %9 : vector<8x128xf32>
    %31 = arith.mulf %25, %29 : vector<8x128xf32>
    %32 = arith.addf %30, %31 : vector<8x128xf32>
    %33 = math.tanh %32 : vector<8x128xf32>
    %34 = arith.mulf %27, %33 : vector<8x128xf32>
    %c1_i32 = arith.constant 1 : i32
    %c8_i32_17 = arith.constant 8 : i32
    %35 = arith.muli %c1_i32, %c8_i32_17 : i32
    %36 = tpu.assume_multiple %35, 8 : i32
    %c0_18 = arith.constant 0 : index
    %c0_19 = arith.constant 0 : index
    %37 = vector.load %arg3[%c0_18, %c0_19] : memref<128x512xf32, #tpu.memory_space<vmem>>, vector<128x512xf32>
    %cst_20 = arith.constant dense<0.000000e+00> : vector<8x512xf32>
    %38 = tpu.matmul %34, %37, %cst_20 {dimension_numbers = #tpu.dot_dimension_numbers<[1], [0], [0], [1], [0, 0, 1, 1], [], []>} : vector<8x128xf32>, vector<128x512xf32>, vector<8x512xf32> -> vector<8x512xf32>
    %39 = arith.index_cast %36 : i32 to index
    %c0_21 = arith.constant 0 : index
    %40 = vector.load %arg8[%39, %c0_21] : memref<64x512xf32, #tpu.memory_space<vmem>>, vector<8x512xf32>
    %41 = arith.addf %38, %40 : vector<8x512xf32>
    %42 = vector.extract_strided_slice %41 {offsets = [0, 0], sizes = [8, 384], strides = [1, 1]} : vector<8x512xf32> to vector<8x384xf32>
    %cst_22 = arith.constant 5.000000e-01 : f32
    %43 = vector.broadcast %cst_22 : f32 to vector<8x384xf32>
    %44 = arith.mulf %43, %42 : vector<8x384xf32>
    %45 = math.tanh %44 : vector<8x384xf32>
    %cst_23 = arith.constant 1.000000e+00 : f32
    %46 = vector.broadcast %cst_23 : f32 to vector<8x384xf32>
    %47 = arith.addf %45, %46 : vector<8x384xf32>
    %cst_24 = arith.constant 5.000000e-01 : f32
    %48 = vector.broadcast %cst_24 : f32 to vector<8x384xf32>
    %49 = arith.mulf %48, %47 : vector<8x384xf32>
    %50 = vector.extract_strided_slice %49 {offsets = [0, 0], sizes = [8, 128], strides = [1, 1]} : vector<8x384xf32> to vector<8x128xf32>
    %51 = vector.extract_strided_slice %49 {offsets = [0, 128], sizes = [8, 128], strides = [1, 1]} : vector<8x384xf32> to vector<8x128xf32>
    %52 = vector.extract_strided_slice %49 {offsets = [0, 256], sizes = [8, 128], strides = [1, 1]} : vector<8x384xf32> to vector<8x128xf32>
    %53 = vector.extract_strided_slice %41 {offsets = [0, 384], sizes = [8, 128], strides = [1, 1]} : vector<8x512xf32> to vector<8x128xf32>
    %54 = math.tanh %53 : vector<8x128xf32>
    %55 = arith.mulf %51, %32 : vector<8x128xf32>
    %56 = arith.mulf %50, %54 : vector<8x128xf32>
    %57 = arith.addf %55, %56 : vector<8x128xf32>
    %58 = math.tanh %57 : vector<8x128xf32>
    %59 = arith.mulf %52, %58 : vector<8x128xf32>
    %c2_i32 = arith.constant 2 : i32
    %c8_i32_25 = arith.constant 8 : i32
    %60 = arith.muli %c2_i32, %c8_i32_25 : i32
    %61 = tpu.assume_multiple %60, 8 : i32
    %c0_26 = arith.constant 0 : index
    %c0_27 = arith.constant 0 : index
    %62 = vector.load %arg3[%c0_26, %c0_27] : memref<128x512xf32, #tpu.memory_space<vmem>>, vector<128x512xf32>
    %cst_28 = arith.constant dense<0.000000e+00> : vector<8x512xf32>
    %63 = tpu.matmul %59, %62, %cst_28 {dimension_numbers = #tpu.dot_dimension_numbers<[1], [0], [0], [1], [0, 0, 1, 1], [], []>} : vector<8x128xf32>, vector<128x512xf32>, vector<8x512xf32> -> vector<8x512xf32>
    %64 = arith.index_cast %61 : i32 to index
    %c0_29 = arith.constant 0 : index
    %65 = vector.load %arg8[%64, %c0_29] : memref<64x512xf32, #tpu.memory_space<vmem>>, vector<8x512xf32>
    %66 = arith.addf %63, %65 : vector<8x512xf32>
    %67 = vector.extract_strided_slice %66 {offsets = [0, 0], sizes = [8, 384], strides = [1, 1]} : vector<8x512xf32> to vector<8x384xf32>
    %cst_30 = arith.constant 5.000000e-01 : f32
    %68 = vector.broadcast %cst_30 : f32 to vector<8x384xf32>
    %69 = arith.mulf %68, %67 : vector<8x384xf32>
    %70 = math.tanh %69 : vector<8x384xf32>
    %cst_31 = arith.constant 1.000000e+00 : f32
    %71 = vector.broadcast %cst_31 : f32 to vector<8x384xf32>
    %72 = arith.addf %70, %71 : vector<8x384xf32>
    %cst_32 = arith.constant 5.000000e-01 : f32
    %73 = vector.broadcast %cst_32 : f32 to vector<8x384xf32>
    %74 = arith.mulf %73, %72 : vector<8x384xf32>
    %75 = vector.extract_strided_slice %74 {offsets = [0, 0], sizes = [8, 128], strides = [1, 1]} : vector<8x384xf32> to vector<8x128xf32>
    %76 = vector.extract_strided_slice %74 {offsets = [0, 128], sizes = [8, 128], strides = [1, 1]} : vector<8x384xf32> to vector<8x128xf32>
    %77 = vector.extract_strided_slice %74 {offsets = [0, 256], sizes = [8, 128], strides = [1, 1]} : vector<8x384xf32> to vector<8x128xf32>
    %78 = vector.extract_strided_slice %66 {offsets = [0, 384], sizes = [8, 128], strides = [1, 1]} : vector<8x512xf32> to vector<8x128xf32>
    %79 = math.tanh %78 : vector<8x128xf32>
    %80 = arith.mulf %76, %57 : vector<8x128xf32>
    %81 = arith.mulf %75, %79 : vector<8x128xf32>
    %82 = arith.addf %80, %81 : vector<8x128xf32>
    %83 = math.tanh %82 : vector<8x128xf32>
    %84 = arith.mulf %77, %83 : vector<8x128xf32>
    %c3_i32 = arith.constant 3 : i32
    %c8_i32_33 = arith.constant 8 : i32
    %85 = arith.muli %c3_i32, %c8_i32_33 : i32
    %86 = tpu.assume_multiple %85, 8 : i32
    %c0_34 = arith.constant 0 : index
    %c0_35 = arith.constant 0 : index
    %87 = vector.load %arg3[%c0_34, %c0_35] : memref<128x512xf32, #tpu.memory_space<vmem>>, vector<128x512xf32>
    %cst_36 = arith.constant dense<0.000000e+00> : vector<8x512xf32>
    %88 = tpu.matmul %84, %87, %cst_36 {dimension_numbers = #tpu.dot_dimension_numbers<[1], [0], [0], [1], [0, 0, 1, 1], [], []>} : vector<8x128xf32>, vector<128x512xf32>, vector<8x512xf32> -> vector<8x512xf32>
    %89 = arith.index_cast %86 : i32 to index
    %c0_37 = arith.constant 0 : index
    %90 = vector.load %arg8[%89, %c0_37] : memref<64x512xf32, #tpu.memory_space<vmem>>, vector<8x512xf32>
    %91 = arith.addf %88, %90 : vector<8x512xf32>
    %92 = vector.extract_strided_slice %91 {offsets = [0, 0], sizes = [8, 384], strides = [1, 1]} : vector<8x512xf32> to vector<8x384xf32>
    %cst_38 = arith.constant 5.000000e-01 : f32
    %93 = vector.broadcast %cst_38 : f32 to vector<8x384xf32>
    %94 = arith.mulf %93, %92 : vector<8x384xf32>
    %95 = math.tanh %94 : vector<8x384xf32>
    %cst_39 = arith.constant 1.000000e+00 : f32
    %96 = vector.broadcast %cst_39 : f32 to vector<8x384xf32>
    %97 = arith.addf %95, %96 : vector<8x384xf32>
    %cst_40 = arith.constant 5.000000e-01 : f32
    %98 = vector.broadcast %cst_40 : f32 to vector<8x384xf32>
    %99 = arith.mulf %98, %97 : vector<8x384xf32>
    %100 = vector.extract_strided_slice %99 {offsets = [0, 0], sizes = [8, 128], strides = [1, 1]} : vector<8x384xf32> to vector<8x128xf32>
    %101 = vector.extract_strided_slice %99 {offsets = [0, 128], sizes = [8, 128], strides = [1, 1]} : vector<8x384xf32> to vector<8x128xf32>
    %102 = vector.extract_strided_slice %99 {offsets = [0, 256], sizes = [8, 128], strides = [1, 1]} : vector<8x384xf32> to vector<8x128xf32>
    %103 = vector.extract_strided_slice %91 {offsets = [0, 384], sizes = [8, 128], strides = [1, 1]} : vector<8x512xf32> to vector<8x128xf32>
    %104 = math.tanh %103 : vector<8x128xf32>
    %105 = arith.mulf %101, %82 : vector<8x128xf32>
    %106 = arith.mulf %100, %104 : vector<8x128xf32>
    %107 = arith.addf %105, %106 : vector<8x128xf32>
    %108 = math.tanh %107 : vector<8x128xf32>
    %109 = arith.mulf %102, %108 : vector<8x128xf32>
    %c4_i32 = arith.constant 4 : i32
    %c8_i32_41 = arith.constant 8 : i32
    %110 = arith.muli %c4_i32, %c8_i32_41 : i32
    %111 = tpu.assume_multiple %110, 8 : i32
    %c0_42 = arith.constant 0 : index
    %c0_43 = arith.constant 0 : index
    %112 = vector.load %arg3[%c0_42, %c0_43] : memref<128x512xf32, #tpu.memory_space<vmem>>, vector<128x512xf32>
    %cst_44 = arith.constant dense<0.000000e+00> : vector<8x512xf32>
    %113 = tpu.matmul %109, %112, %cst_44 {dimension_numbers = #tpu.dot_dimension_numbers<[1], [0], [0], [1], [0, 0, 1, 1], [], []>} : vector<8x128xf32>, vector<128x512xf32>, vector<8x512xf32> -> vector<8x512xf32>
    %114 = arith.index_cast %111 : i32 to index
    %c0_45 = arith.constant 0 : index
    %115 = vector.load %arg8[%114, %c0_45] : memref<64x512xf32, #tpu.memory_space<vmem>>, vector<8x512xf32>
    %116 = arith.addf %113, %115 : vector<8x512xf32>
    %117 = vector.extract_strided_slice %116 {offsets = [0, 0], sizes = [8, 384], strides = [1, 1]} : vector<8x512xf32> to vector<8x384xf32>
    %cst_46 = arith.constant 5.000000e-01 : f32
    %118 = vector.broadcast %cst_46 : f32 to vector<8x384xf32>
    %119 = arith.mulf %118, %117 : vector<8x384xf32>
    %120 = math.tanh %119 : vector<8x384xf32>
    %cst_47 = arith.constant 1.000000e+00 : f32
    %121 = vector.broadcast %cst_47 : f32 to vector<8x384xf32>
    %122 = arith.addf %120, %121 : vector<8x384xf32>
    %cst_48 = arith.constant 5.000000e-01 : f32
    %123 = vector.broadcast %cst_48 : f32 to vector<8x384xf32>
    %124 = arith.mulf %123, %122 : vector<8x384xf32>
    %125 = vector.extract_strided_slice %124 {offsets = [0, 0], sizes = [8, 128], strides = [1, 1]} : vector<8x384xf32> to vector<8x128xf32>
    %126 = vector.extract_strided_slice %124 {offsets = [0, 128], sizes = [8, 128], strides = [1, 1]} : vector<8x384xf32> to vector<8x128xf32>
    %127 = vector.extract_strided_slice %124 {offsets = [0, 256], sizes = [8, 128], strides = [1, 1]} : vector<8x384xf32> to vector<8x128xf32>
    %128 = vector.extract_strided_slice %116 {offsets = [0, 384], sizes = [8, 128], strides = [1, 1]} : vector<8x512xf32> to vector<8x128xf32>
    %129 = math.tanh %128 : vector<8x128xf32>
    %130 = arith.mulf %126, %107 : vector<8x128xf32>
    %131 = arith.mulf %125, %129 : vector<8x128xf32>
    %132 = arith.addf %130, %131 : vector<8x128xf32>
    %133 = math.tanh %132 : vector<8x128xf32>
    %134 = arith.mulf %127, %133 : vector<8x128xf32>
    %c5_i32 = arith.constant 5 : i32
    %c8_i32_49 = arith.constant 8 : i32
    %135 = arith.muli %c5_i32, %c8_i32_49 : i32
    %136 = tpu.assume_multiple %135, 8 : i32
    %c0_50 = arith.constant 0 : index
    %c0_51 = arith.constant 0 : index
    %137 = vector.load %arg3[%c0_50, %c0_51] : memref<128x512xf32, #tpu.memory_space<vmem>>, vector<128x512xf32>
    %cst_52 = arith.constant dense<0.000000e+00> : vector<8x512xf32>
    %138 = tpu.matmul %134, %137, %cst_52 {dimension_numbers = #tpu.dot_dimension_numbers<[1], [0], [0], [1], [0, 0, 1, 1], [], []>} : vector<8x128xf32>, vector<128x512xf32>, vector<8x512xf32> -> vector<8x512xf32>
    %139 = arith.index_cast %136 : i32 to index
    %c0_53 = arith.constant 0 : index
    %140 = vector.load %arg8[%139, %c0_53] : memref<64x512xf32, #tpu.memory_space<vmem>>, vector<8x512xf32>
    %141 = arith.addf %138, %140 : vector<8x512xf32>
    %142 = vector.extract_strided_slice %141 {offsets = [0, 0], sizes = [8, 384], strides = [1, 1]} : vector<8x512xf32> to vector<8x384xf32>
    %cst_54 = arith.constant 5.000000e-01 : f32
    %143 = vector.broadcast %cst_54 : f32 to vector<8x384xf32>
    %144 = arith.mulf %143, %142 : vector<8x384xf32>
    %145 = math.tanh %144 : vector<8x384xf32>
    %cst_55 = arith.constant 1.000000e+00 : f32
    %146 = vector.broadcast %cst_55 : f32 to vector<8x384xf32>
    %147 = arith.addf %145, %146 : vector<8x384xf32>
    %cst_56 = arith.constant 5.000000e-01 : f32
    %148 = vector.broadcast %cst_56 : f32 to vector<8x384xf32>
    %149 = arith.mulf %148, %147 : vector<8x384xf32>
    %150 = vector.extract_strided_slice %149 {offsets = [0, 0], sizes = [8, 128], strides = [1, 1]} : vector<8x384xf32> to vector<8x128xf32>
    %151 = vector.extract_strided_slice %149 {offsets = [0, 128], sizes = [8, 128], strides = [1, 1]} : vector<8x384xf32> to vector<8x128xf32>
    %152 = vector.extract_strided_slice %149 {offsets = [0, 256], sizes = [8, 128], strides = [1, 1]} : vector<8x384xf32> to vector<8x128xf32>
    %153 = vector.extract_strided_slice %141 {offsets = [0, 384], sizes = [8, 128], strides = [1, 1]} : vector<8x512xf32> to vector<8x128xf32>
    %154 = math.tanh %153 : vector<8x128xf32>
    %155 = arith.mulf %151, %132 : vector<8x128xf32>
    %156 = arith.mulf %150, %154 : vector<8x128xf32>
    %157 = arith.addf %155, %156 : vector<8x128xf32>
    %158 = math.tanh %157 : vector<8x128xf32>
    %159 = arith.mulf %152, %158 : vector<8x128xf32>
    %c6_i32 = arith.constant 6 : i32
    %c8_i32_57 = arith.constant 8 : i32
    %160 = arith.muli %c6_i32, %c8_i32_57 : i32
    %161 = tpu.assume_multiple %160, 8 : i32
    %c0_58 = arith.constant 0 : index
    %c0_59 = arith.constant 0 : index
    %162 = vector.load %arg3[%c0_58, %c0_59] : memref<128x512xf32, #tpu.memory_space<vmem>>, vector<128x512xf32>
    %cst_60 = arith.constant dense<0.000000e+00> : vector<8x512xf32>
    %163 = tpu.matmul %159, %162, %cst_60 {dimension_numbers = #tpu.dot_dimension_numbers<[1], [0], [0], [1], [0, 0, 1, 1], [], []>} : vector<8x128xf32>, vector<128x512xf32>, vector<8x512xf32> -> vector<8x512xf32>
    %164 = arith.index_cast %161 : i32 to index
    %c0_61 = arith.constant 0 : index
    %165 = vector.load %arg8[%164, %c0_61] : memref<64x512xf32, #tpu.memory_space<vmem>>, vector<8x512xf32>
    %166 = arith.addf %163, %165 : vector<8x512xf32>
    %167 = vector.extract_strided_slice %166 {offsets = [0, 0], sizes = [8, 384], strides = [1, 1]} : vector<8x512xf32> to vector<8x384xf32>
    %cst_62 = arith.constant 5.000000e-01 : f32
    %168 = vector.broadcast %cst_62 : f32 to vector<8x384xf32>
    %169 = arith.mulf %168, %167 : vector<8x384xf32>
    %170 = math.tanh %169 : vector<8x384xf32>
    %cst_63 = arith.constant 1.000000e+00 : f32
    %171 = vector.broadcast %cst_63 : f32 to vector<8x384xf32>
    %172 = arith.addf %170, %171 : vector<8x384xf32>
    %cst_64 = arith.constant 5.000000e-01 : f32
    %173 = vector.broadcast %cst_64 : f32 to vector<8x384xf32>
    %174 = arith.mulf %173, %172 : vector<8x384xf32>
    %175 = vector.extract_strided_slice %174 {offsets = [0, 0], sizes = [8, 128], strides = [1, 1]} : vector<8x384xf32> to vector<8x128xf32>
    %176 = vector.extract_strided_slice %174 {offsets = [0, 128], sizes = [8, 128], strides = [1, 1]} : vector<8x384xf32> to vector<8x128xf32>
    %177 = vector.extract_strided_slice %174 {offsets = [0, 256], sizes = [8, 128], strides = [1, 1]} : vector<8x384xf32> to vector<8x128xf32>
    %178 = vector.extract_strided_slice %166 {offsets = [0, 384], sizes = [8, 128], strides = [1, 1]} : vector<8x512xf32> to vector<8x128xf32>
    %179 = math.tanh %178 : vector<8x128xf32>
    %180 = arith.mulf %176, %157 : vector<8x128xf32>
    %181 = arith.mulf %175, %179 : vector<8x128xf32>
    %182 = arith.addf %180, %181 : vector<8x128xf32>
    %183 = math.tanh %182 : vector<8x128xf32>
    %184 = arith.mulf %177, %183 : vector<8x128xf32>
    %c7_i32 = arith.constant 7 : i32
    %c8_i32_65 = arith.constant 8 : i32
    %185 = arith.muli %c7_i32, %c8_i32_65 : i32
    %186 = tpu.assume_multiple %185, 8 : i32
    %c0_66 = arith.constant 0 : index
    %c0_67 = arith.constant 0 : index
    %187 = vector.load %arg3[%c0_66, %c0_67] : memref<128x512xf32, #tpu.memory_space<vmem>>, vector<128x512xf32>
    %cst_68 = arith.constant dense<0.000000e+00> : vector<8x512xf32>
    %188 = tpu.matmul %184, %187, %cst_68 {dimension_numbers = #tpu.dot_dimension_numbers<[1], [0], [0], [1], [0, 0, 1, 1], [], []>} : vector<8x128xf32>, vector<128x512xf32>, vector<8x512xf32> -> vector<8x512xf32>
    %189 = arith.index_cast %186 : i32 to index
    %c0_69 = arith.constant 0 : index
    %190 = vector.load %arg8[%189, %c0_69] : memref<64x512xf32, #tpu.memory_space<vmem>>, vector<8x512xf32>
    %191 = arith.addf %188, %190 : vector<8x512xf32>
    %192 = vector.extract_strided_slice %191 {offsets = [0, 0], sizes = [8, 384], strides = [1, 1]} : vector<8x512xf32> to vector<8x384xf32>
    %cst_70 = arith.constant 5.000000e-01 : f32
    %193 = vector.broadcast %cst_70 : f32 to vector<8x384xf32>
    %194 = arith.mulf %193, %192 : vector<8x384xf32>
    %195 = math.tanh %194 : vector<8x384xf32>
    %cst_71 = arith.constant 1.000000e+00 : f32
    %196 = vector.broadcast %cst_71 : f32 to vector<8x384xf32>
    %197 = arith.addf %195, %196 : vector<8x384xf32>
    %cst_72 = arith.constant 5.000000e-01 : f32
    %198 = vector.broadcast %cst_72 : f32 to vector<8x384xf32>
    %199 = arith.mulf %198, %197 : vector<8x384xf32>
    %200 = vector.extract_strided_slice %199 {offsets = [0, 0], sizes = [8, 128], strides = [1, 1]} : vector<8x384xf32> to vector<8x128xf32>
    %201 = vector.extract_strided_slice %199 {offsets = [0, 128], sizes = [8, 128], strides = [1, 1]} : vector<8x384xf32> to vector<8x128xf32>
    %202 = vector.extract_strided_slice %199 {offsets = [0, 256], sizes = [8, 128], strides = [1, 1]} : vector<8x384xf32> to vector<8x128xf32>
    %203 = vector.extract_strided_slice %191 {offsets = [0, 384], sizes = [8, 128], strides = [1, 1]} : vector<8x512xf32> to vector<8x128xf32>
    %204 = math.tanh %203 : vector<8x128xf32>
    %205 = arith.mulf %201, %182 : vector<8x128xf32>
    %206 = arith.mulf %200, %204 : vector<8x128xf32>
    %207 = arith.addf %205, %206 : vector<8x128xf32>
    %208 = math.tanh %207 : vector<8x128xf32>
    %209 = arith.mulf %202, %208 : vector<8x128xf32>
    %c8_i32_73 = arith.constant 8 : i32
    %cst_74 = arith.constant 0.000000e+00 : f32
    %210 = vector.broadcast %cst_74 : f32 to vector<8x128xf32>
    %211 = arith.maximumf %209, %210 : vector<8x128xf32>
    %c0_75 = arith.constant 0 : index
    %c0_76 = arith.constant 0 : index
    %212 = vector.load %arg5[%c0_75, %c0_76] : memref<1x128xf32, #tpu.memory_space<vmem>>, vector<1x128xf32>
    %213 = vector.broadcast %212 : vector<1x128xf32> to vector<8x128xf32>
    %214 = arith.mulf %211, %213 : vector<8x128xf32>
    %cst_77 = arith.constant dense<0.000000e+00> : vector<8xf32>
    %215 = vector.multi_reduction <add>, %214, %cst_77 [1] : vector<8x128xf32> to vector<8xf32>
    %216 = vector.shape_cast %215 : vector<8xf32> to vector<8x1xf32>
    %c0_78 = arith.constant 0 : index
    %c0_79 = arith.constant 0 : index
    %217 = vector.load %arg6[%c0_78, %c0_79] : memref<1x18xf32, #tpu.memory_space<vmem>>, vector<1x18xf32>
    %218 = vector.broadcast %216 : vector<8x1xf32> to vector<8x18xf32>
    %219 = vector.broadcast %217 : vector<1x18xf32> to vector<8x18xf32>
    %220 = arith.addf %218, %219 : vector<8x18xf32>
    %c0_80 = arith.constant 0 : index
    %c0_81 = arith.constant 0 : index
    %221 = vector.load %arg7[%c0_80, %c0_81] : memref<8x18xf32, #tpu.memory_space<vmem>>, vector<8x18xf32>
    tpu.vector_store %arg7[%c0_80, %c0_81], %220 {strides = array<i32>} : memref<8x18xf32, #tpu.memory_space<vmem>>, vector<8x18xf32>,
    return
  }
  func.func @transform_0(%arg0: i32) -> (i32, i32, i32) {
    %c0_i32 = arith.constant 0 : i32
    %c0_i32_0 = arith.constant 0 : i32
    %c0_i32_1 = arith.constant 0 : i32
    return %arg0, %c0_i32, %c0_i32_0 : i32, i32, i32
  }
  func.func @transform_1(%arg0: i32) -> (i32, i32) {
    %c0_i32 = arith.constant 0 : i32
    %c0_i32_0 = arith.constant 0 : i32
    %c0_i32_1 = arith.constant 0 : i32
    return %c0_i32, %c0_i32_0 : i32, i32
  }
  func.func @transform_2(%arg0: i32) -> (i32, i32) {
    %c0_i32 = arith.constant 0 : i32
    %c0_i32_0 = arith.constant 0 : i32
    %c0_i32_1 = arith.constant 0 : i32
    return %c0_i32, %c0_i32_0 : i32, i32
  }
  func.func @transform_3(%arg0: i32) -> (i32, i32) {
    %c0_i32 = arith.constant 0 : i32
    %c0_i32_0 = arith.constant 0 : i32
    %c0_i32_1 = arith.constant 0 : i32
    return %c0_i32, %c0_i32_0 : i32, i32
  }
  func.func @transform_4(%arg0: i32) -> (i32, i32) {
    %c0_i32 = arith.constant 0 : i32
    %c0_i32_0 = arith.constant 0 : i32
    %c0_i32_1 = arith.constant 0 : i32
    return %c0_i32, %c0_i32_0 : i32, i32
  }
  func.func @transform_5(%arg0: i32) -> (i32, i32) {
    %c0_i32 = arith.constant 0 : i32
    %c0_i32_0 = arith.constant 0 : i32
    %c0_i32_1 = arith.constant 0 : i32
    return %c0_i32, %c0_i32_0 : i32, i32
  }
  func.func @transform_6(%arg0: i32) -> (i32, i32) {
    %c0_i32 = arith.constant 0 : i32
    %c0_i32_0 = arith.constant 0 : i32
    return %arg0, %c0_i32 : i32, i32
  }
}

</mosaic_0001>

<llo_original>
// kernel: rl_forward_all_actions.1
$region0: #{rl_forward_all_actions.1}
  #allocation0 [shape = 'u32[]', space=smem, size = 0x4, offset = 0x4, fixed_abs, tag = 'smem constant byte address 0x4 - core index']
  #allocation1 [shape = 'u32[144,128]{1,0:T(1,128)}', space=vmem, size = 0x12000, scoped, tag = 'internal scratch']
  #allocation2 [shape = 'f32[64,512]{1,0:T(8,128)}', space=vmem, size = 0x20000, scoped, tag = 'scratch operand']
  %s0 = inlined_call_operand.vmem [shape: f32[1,64,11], index: 0, kind: input, shape index: {}]
  %s1 = inlined_call_operand.vmem [shape: f32[11,512], index: 1, kind: input, shape index: {}]
  %s2 = inlined_call_operand.hbm [shape: f32[128,512], index: 2, kind: input, shape index: {}]
  %s3 = inlined_call_operand.vmem [shape: f32[1,512], index: 3, kind: input, shape index: {}]
  %s4 = inlined_call_operand.vmem [shape: f32[1,128], index: 4, kind: input, shape index: {}]
  %s5 = inlined_call_operand.vmem [shape: f32[1,18], index: 5, kind: input, shape index: {}]
  %s6 = inlined_call_operand.hbm [shape: f32[8,18], index: 6, kind: output, shape index: {}]
  %s7 = sld [smem:[#allocation0]]
  $region38: #{rl_forward_all_actions.1} parent=0
    _
  %s9 = ssub.s32 1, %s7
  %s10 = scalar_select 0, %s9, %s7
  $region1: #{rl_forward_all_actions.1} parent=0
    #allocation3 [shape = 'u8[262144]{0}', space=vmem, size = 0x40000, scoped, tag = 'input window, operand 2, single buffered']
    #allocation4 [shape = 's32[1]{0}', space=sflag, size = 0x4, scoped, tag = 'scoped memory for rl_forward_all_actions.1']
    #allocation5 [shape = 's32[1]{0}', space=sflag, size = 0x4, scoped, tag = 'scoped memory for rl_forward_all_actions.1']
    #allocation6 [shape = 'u8[4096]{0}', space=vmem, size = 0x1000, scoped, tag = 'output window, operand 0, single buffered']
    %11 = vsyncpa [#allocation4], 0
    %12 = vsyncpa [#allocation5], 0
    // Predicated region
    $region2: #{rl_forward_all_actions.1} parent=1 // pred_check
      _
    $region3: #{rl_forward_all_actions.1} parent=1 // pred_check_branch
      %14 = sbr.rel (0) target = $region5
    $region4: #{rl_forward_all_actions.1} parent=1 // pred_region
      _
    $region5: #{rl_forward_all_actions.1} parent=1 // pred_fallthru
      _
    // Predicated region
    $region6: #{rl_forward_all_actions.1} parent=1 // pred_check
      _
    $region7: #{rl_forward_all_actions.1} parent=1 // pred_check_branch
      %16 = sbr.rel (0) target = $region9
    $region8: #{rl_forward_all_actions.1} parent=1 // pred_region
      _
    $region9: #{rl_forward_all_actions.1} parent=1 // pred_fallthru
      _
    // Predicated region
    $region10: #{rl_forward_all_actions.1} parent=1 // pred_check
      _
    $region11: #{rl_forward_all_actions.1} parent=1 // pred_check_branch
      %18 = sbr.rel (0) target = $region13
    $region12: #{rl_forward_all_actions.1} parent=1 // pred_region
      %s20 = ssub.s32 8192, 8192
      %21 = vsyncadd [#allocation4], %s20
      %s22 = sshll.u32 [#allocation3], 4
      %s23 = int_to_ptr.vmem [resolvable:$true] %s22
      %28 = dma.hbm_to_vmem [thread:$0]  %s2, 8192, %s23, [#allocation4], 512, 512, 32
    $region13: #{rl_forward_all_actions.1} parent=1 // pred_fallthru
      _
    // Predicated region
    $region14: #{rl_forward_all_actions.1} parent=1 // pred_check
      _
    $region15: #{rl_forward_all_actions.1} parent=1 // pred_check_branch
      %30 = sbr.rel (0) target = $region17
    $region16: #{rl_forward_all_actions.1} parent=1 // pred_region
      _
    $region17: #{rl_forward_all_actions.1} parent=1 // pred_fallthru
      _
    // Predicated region
    $region18: #{rl_forward_all_actions.1} parent=1 // pred_check
      _
    $region19: #{rl_forward_all_actions.1} parent=1 // pred_check_branch
      %32 = sbr.rel (0) target = $region21
    $region20: #{rl_forward_all_actions.1} parent=1 // pred_region
      _
    $region21: #{rl_forward_all_actions.1} parent=1 // pred_fallthru
      _
    // Predicated region
    $region22: #{rl_forward_all_actions.1} parent=1 // pred_check
      _
    $region23: #{rl_forward_all_actions.1} parent=1 // pred_check_branch
      %34 = sbr.rel (0) target = $region25
    $region24: #{rl_forward_all_actions.1} parent=1 // pred_region
      _
    $region25: #{rl_forward_all_actions.1} parent=1 // pred_fallthru
      _
    // Predicated region
    $region26: #{rl_forward_all_actions.1} parent=1 // pred_check
      _
    $region27: #{rl_forward_all_actions.1} parent=1 // pred_check_branch
      %36 = sbr.rel (0) target = $region29
    $region28: #{rl_forward_all_actions.1} parent=1 // pred_region
      %37 = dma.done [#allocation4], 8192
    $region29: #{rl_forward_all_actions.1} parent=1 // pred_fallthru
      _
    %v38 = vld [vmem:[%s0] sm:$0xff]
    %v39 = vld [vmem:[%s0 + $0x8] sm:$0xff]
    %v40 = vld [vmem:[%s0 + $0x10] sm:$0xff]
    %v41 = vld [vmem:[%s0 + $0x18] sm:$0xff]
    %v42 = vld [vmem:[%s0 + $0x20] sm:$0xff]
    %v43 = vld [vmem:[%s0 + $0x28] sm:$0xff]
    %v44 = vld [vmem:[%s0 + $0x30] sm:$0xff]
    %v45 = vld [vmem:[%s0 + $0x38] sm:$0xff]
    %v46 = vld [vmem:[%s1] sm:$0xff]
    %v47 = vld [vmem:[%s1 + $0x8] sm:$0xff]
    %v48 = vld [vmem:[%s1 + $0x10] sm:$0xff]
    %v49 = vld [vmem:[%s1 + $0x18] sm:$0xff]
    %v50 = vld [vmem:[%s1 + $0x20] sm:$0x7]
    %v51 = vld [vmem:[%s1 + $0x28] sm:$0x7]
    %v52 = vld [vmem:[%s1 + $0x30] sm:$0x7]
    %v53 = vld [vmem:[%s1 + $0x38] sm:$0x7]
    %v54 = vld [vmem:[%s3] sm:$0xf]
    %v56 = vlaneseq
    %v57 = vshrl.u32 %v56, 7
    %v58 = vsub.s32 0, %v57
    %v59 = vrot.slane %v54, %v58
    %v60 = vlaneseq
    %v61 = vshrl.u32 %v60, 7
    %v62 = vsub.s32 1, %v61
    %v63 = vrot.slane %v54, %v62
    %v64 = vlaneseq
    %v65 = vshrl.u32 %v64, 7
    %v66 = vsub.s32 2, %v65
    %v67 = vrot.slane %v54, %v66
    %v68 = vlaneseq
    %v69 = vshrl.u32 %v68, 7
    %v70 = vsub.s32 3, %v69
    %v71 = vrot.slane %v54, %v70
    %vm76 = vcmask 89088
    %v78 = vsel %vm76, %v38, 0
    %v81 = vsel %vm76, %v39, 0
    %v84 = vsel %vm76, %v40, 0
    %v87 = vsel %vm76, %v41, 0
    %v90 = vsel %vm76, %v42, 0
    %v93 = vsel %vm76, %v43, 0
    %v96 = vsel %vm76, %v44, 0
    %v99 = vsel %vm76, %v45, 0
    %vm101 = vcmask 1042432
    %v103 = vsel %vm101, %v50, 0
    %v106 = vsel %vm101, %v51, 0
    %v109 = vsel %vm101, %v52, 0
    %v112 = vsel %vm101, %v53, 0
    %114 = vmatprep.subr.mxu0 %v47
    %115 = vmatpush1.msra.mxu0 %v46
    %116 = vmatprep.subr.mxu0 %v106
    %117 = vmatpush1.msra.mxu0 %v103
    %118 = vmatprep.subr.mxu0 0.0
    %119 = vmatpush1.msra.mxu0 0.0
    %120 = vmatprep.subr.mxu0 0.0
    %121 = vmatpush1.msra.mxu0 0.0
    %122 = vmatprep.subr.mxu0 0.0
    %123 = vmatpush1.msra.mxu0 0.0
    %124 = vmatprep.subr.mxu0 0.0
    %125 = vmatpush1.msra.mxu0 0.0
    %126 = vmatprep.subr.mxu0 0.0
    %127 = vmatpush1.msra.mxu0 0.0
    %128 = vmatprep.subr.mxu0 0.0
    %129 = vmatpush1.msra.mxu0 0.0
    %130 = vmatprep.subr.mxu0 0.0
    %131 = vmatpush1.msra.mxu0 0.0
    %132 = vmatprep.subr.mxu0 0.0
    %133 = vmatpush1.msra.mxu0 0.0
    %134 = vmatprep.subr.mxu0 0.0
    %135 = vmatpush1.msra.mxu0 0.0
    %136 = vmatprep.subr.mxu0 0.0
    %137 = vmatpush1.msra.mxu0 0.0
    %138 = vmatprep.subr.mxu0 0.0
    %139 = vmatpush1.msra.mxu0 0.0
    %140 = vmatprep.subr.mxu0 0.0
    %141 = vmatpush1.msra.mxu0 0.0
    %142 = vmatprep.subr.mxu0 0.0
    %143 = vmatpush1.msra.mxu0 0.0
    %144 = vmatprep.subr.mxu0 0.0
    %145 = vmatpush1.msra.mxu0 0.0
    %146 = vmatprep.subr.mxu0 0.0
    %147 = vmatpush1.msra.mxu0 0.0
    %148 = vmatprep.subr.mxu0 0.0
    %149 = vmatpush1.msra.mxu0 0.0
    %150 = vmatprep.subr.mxu0 0.0
    %151 = vmatpush1.msra.mxu0 0.0
    %152 = vmatprep.subr.mxu0 0.0
    %153 = vmatpush1.msra.mxu0 0.0
    %154 = vmatprep.subr.mxu0 0.0
    %155 = vmatpush1.msra.mxu0 0.0
    %156 = vmatprep.subr.mxu0 0.0
    %157 = vmatpush1.msra.mxu0 0.0
    %158 = vmatprep.subr.mxu0 0.0
    %159 = vmatpush1.msra.mxu0 0.0
    %160 = vmatprep.subr.mxu0 0.0
    %161 = vmatpush1.msra.mxu0 0.0
    %162 = vmatprep.subr.mxu0 0.0
    %163 = vmatpush1.msra.mxu0 0.0
    %164 = vmatprep.subr.mxu0 0.0
    %165 = vmatpush1.msra.mxu0 0.0
    %166 = vmatprep.subr.mxu0 0.0
    %167 = vmatpush1.msra.mxu0 0.0
    %168 = vmatprep.subr.mxu0 0.0
    %169 = vmatpush1.msra.mxu0 0.0
    %170 = vmatprep.subr.mxu0 0.0
    %171 = vmatpush1.msra.mxu0 0.0
    %172 = vmatprep.subr.mxu0 0.0
    %173 = vmatpush1.msra.mxu0 0.0
    %174 = vmatprep.subr.mxu0 0.0
    %175 = vmatpush1.msra.mxu0 0.0
    %176 = vmatprep.subr.mxu0 0.0
    %177 = vmatpush1.msra.mxu0 0.0
    %178 = vmatprep.mubr.f32.mxu0 0.0
    %179 = vmatmul.mubr.f32.gmra.mrb[0].mxu0 %v78
    %v180 = vpop.f32.mrb[0].mxu0
    %v181 = vadd.f32 %v59, %v180
    %v182 = vpop.f32.mrb[0].mxu0
    %v183 = vadd.f32 %v63, %v182
    %184 = vmatprep.mubr.f32.mxu0 0.0
    %185 = vmatmul.mubr.f32.gmra.mrb[0].mxu0 %v81
    %v186 = vpop.f32.mrb[0].mxu0
    %v187 = vadd.f32 %v59, %v186
    %v188 = vpop.f32.mrb[0].mxu0
    %v189 = vadd.f32 %v63, %v188
    %190 = vmatprep.mubr.f32.mxu0 0.0
    %191 = vmatmul.mubr.f32.gmra.mrb[0].mxu0 %v84
    %v192 = vpop.f32.mrb[0].mxu0
    %v193 = vadd.f32 %v59, %v192
    %v194 = vpop.f32.mrb[0].mxu0
    %v195 = vadd.f32 %v63, %v194
    %196 = vmatprep.mubr.f32.mxu0 0.0
    %197 = vmatmul.mubr.f32.gmra.mrb[0].mxu0 %v87
    %v198 = vpop.f32.mrb[0].mxu0
    %v199 = vadd.f32 %v59, %v198
    %v200 = vpop.f32.mrb[0].mxu0
    %v201 = vadd.f32 %v63, %v200
    %202 = vmatprep.mubr.f32.mxu0 0.0
    %203 = vmatmul.mubr.f32.gmra.mrb[0].mxu0 %v90
    %v204 = vpop.f32.mrb[0].mxu0
    %v205 = vadd.f32 %v59, %v204
    %v206 = vpop.f32.mrb[0].mxu0
    %v207 = vadd.f32 %v63, %v206
    %208 = vmatprep.mubr.f32.mxu0 0.0
    %209 = vmatmul.mubr.f32.gmra.mrb[0].mxu0 %v93
    %v210 = vpop.f32.mrb[0].mxu0
    %v211 = vadd.f32 %v59, %v210
    %v212 = vpop.f32.mrb[0].mxu0
    %v213 = vadd.f32 %v63, %v212
    %214 = vmatprep.mubr.f32.mxu0 0.0
    %215 = vmatmul.mubr.f32.gmra.mrb[0].mxu0 %v96
    %v216 = vpop.f32.mrb[0].mxu0
    %v217 = vadd.f32 %v59, %v216
    %v218 = vpop.f32.mrb[0].mxu0
    %v219 = vadd.f32 %v63, %v218
    %220 = vmatprep.mubr.f32.mxu0 0.0
    %221 = vmatmul.mubr.f32.gmra.mrb[0].mxu0 %v99
    %v222 = vpop.f32.mrb[0].mxu0
    %v223 = vadd.f32 %v59, %v222
    %v224 = vpop.f32.mrb[0].mxu0
    %v225 = vadd.f32 %v63, %v224
    %226 = vdwg.mxu0
    %227 = vmatprep.subr.mxu0 %v49
    %228 = vmatpush1.msra.mxu0 %v48
    %229 = vmatprep.subr.mxu0 %v112
    %230 = vmatpush1.msra.mxu0 %v109
    %231 = vmatprep.subr.mxu0 0.0
    %232 = vmatpush1.msra.mxu0 0.0
    %233 = vmatprep.subr.mxu0 0.0
    %234 = vmatpush1.msra.mxu0 0.0
    %235 = vmatprep.subr.mxu0 0.0
    %236 = vmatpush1.msra.mxu0 0.0
    %237 = vmatprep.subr.mxu0 0.0
    %238 = vmatpush1.msra.mxu0 0.0
    %239 = vmatprep.subr.mxu0 0.0
    %240 = vmatpush1.msra.mxu0 0.0
    %241 = vmatprep.subr.mxu0 0.0
    %242 = vmatpush1.msra.mxu0 0.0
    %243 = vmatprep.subr.mxu0 0.0
    %244 = vmatpush1.msra.mxu0 0.0
    %245 = vmatprep.subr.mxu0 0.0
    %246 = vmatpush1.msra.mxu0 0.0
    %247 = vmatprep.subr.mxu0 0.0
    %248 = vmatpush1.msra.mxu0 0.0
    %249 = vmatprep.subr.mxu0 0.0
    %250 = vmatpush1.msra.mxu0 0.0
    %251 = vmatprep.subr.mxu0 0.0
    %252 = vmatpush1.msra.mxu0 0.0
    %253 = vmatprep.subr.mxu0 0.0
    %254 = vmatpush1.msra.mxu0 0.0
    %255 = vmatprep.subr.mxu0 0.0
    %256 = vmatpush1.msra.mxu0 0.0
    %257 = vmatprep.subr.mxu0 0.0
    %258 = vmatpush1.msra.mxu0 0.0
    %259 = vmatprep.subr.mxu0 0.0
    %260 = vmatpush1.msra.mxu0 0.0
    %261 = vmatprep.subr.mxu0 0.0
    %262 = vmatpush1.msra.mxu0 0.0
    %263 = vmatprep.subr.mxu0 0.0
    %264 = vmatpush1.msra.mxu0 0.0
    %265 = vmatprep.subr.mxu0 0.0
    %266 = vmatpush1.msra.mxu0 0.0
    %267 = vmatprep.subr.mxu0 0.0
    %268 = vmatpush1.msra.mxu0 0.0
    %269 = vmatprep.subr.mxu0 0.0
    %270 = vmatpush1.msra.mxu0 0.0
    %271 = vmatprep.subr.mxu0 0.0
    %272 = vmatpush1.msra.mxu0 0.0
    %273 = vmatprep.subr.mxu0 0.0
    %274 = vmatpush1.msra.mxu0 0.0
    %275 = vmatprep.subr.mxu0 0.0
    %276 = vmatpush1.msra.mxu0 0.0
    %277 = vmatprep.subr.mxu0 0.0
    %278 = vmatpush1.msra.mxu0 0.0
    %279 = vmatprep.subr.mxu0 0.0
    %280 = vmatpush1.msra.mxu0 0.0
    %281 = vmatprep.subr.mxu0 0.0
    %282 = vmatpush1.msra.mxu0 0.0
    %283 = vmatprep.subr.mxu0 0.0
    %284 = vmatpush1.msra.mxu0 0.0
    %285 = vmatprep.subr.mxu0 0.0
    %286 = vmatpush1.msra.mxu0 0.0
    %287 = vmatprep.subr.mxu0 0.0
    %288 = vmatpush1.msra.mxu0 0.0
    %289 = vmatprep.subr.mxu0 0.0
    %290 = vmatpush1.msra.mxu0 0.0
    %291 = vmatprep.mubr.f32.mxu0 0.0
    %292 = vmatmul.mubr.f32.gmra.mrb[0].mxu0 %v78
    %v293 = vpop.f32.mrb[0].mxu0
    %v294 = vadd.f32 %v67, %v293
    %v295 = vpop.f32.mrb[0].mxu0
    %v296 = vadd.f32 %v71, %v295
    %297 = vmatprep.mubr.f32.mxu0 0.0
    %298 = vmatmul.mubr.f32.gmra.mrb[0].mxu0 %v81
    %v299 = vpop.f32.mrb[0].mxu0
    %v300 = vadd.f32 %v67, %v299
    %v301 = vpop.f32.mrb[0].mxu0
    %v302 = vadd.f32 %v71, %v301
    %303 = vmatprep.mubr.f32.mxu0 0.0
    %304 = vmatmul.mubr.f32.gmra.mrb[0].mxu0 %v84
    %v305 = vpop.f32.mrb[0].mxu0
    %v306 = vadd.f32 %v67, %v305
    %v307 = vpop.f32.mrb[0].mxu0
    %v308 = vadd.f32 %v71, %v307
    %309 = vmatprep.mubr.f32.mxu0 0.0
    %310 = vmatmul.mubr.f32.gmra.mrb[0].mxu0 %v87
    %v311 = vpop.f32.mrb[0].mxu0
    %v312 = vadd.f32 %v67, %v311
    %v313 = vpop.f32.mrb[0].mxu0
    %v314 = vadd.f32 %v71, %v313
    %315 = vmatprep.mubr.f32.mxu0 0.0
    %316 = vmatmul.mubr.f32.gmra.mrb[0].mxu0 %v90
    %v317 = vpop.f32.mrb[0].mxu0
    %v318 = vadd.f32 %v67, %v317
    %v319 = vpop.f32.mrb[0].mxu0
    %v320 = vadd.f32 %v71, %v319
    %321 = vmatprep.mubr.f32.mxu0 0.0
    %322 = vmatmul.mubr.f32.gmra.mrb[0].mxu0 %v93
    %v323 = vpop.f32.mrb[0].mxu0
    %v324 = vadd.f32 %v67, %v323
    %v325 = vpop.f32.mrb[0].mxu0
    %v326 = vadd.f32 %v71, %v325
    %327 = vmatprep.mubr.f32.mxu0 0.0
    %328 = vmatmul.mubr.f32.gmra.mrb[0].mxu0 %v96
    %v329 = vpop.f32.mrb[0].mxu0
    %v330 = vadd.f32 %v67, %v329
    %v331 = vpop.f32.mrb[0].mxu0
    %v332 = vadd.f32 %v71, %v331
    %333 = vmatprep.mubr.f32.mxu0 0.0
    %334 = vmatmul.mubr.f32.gmra.mrb[0].mxu0 %v99
    %v335 = vpop.f32.mrb[0].mxu0
    %v336 = vadd.f32 %v67, %v335
    %v337 = vpop.f32.mrb[0].mxu0
    %v338 = vadd.f32 %v71, %v337
    %339 = vdwg.mxu0
    %340 = vst [vmem:[#allocation2] sm:$0xff] %v181
    %341 = vst [vmem:[#allocation2 + $0x8] sm:$0xff] %v183
    %342 = vst [vmem:[#allocation2 + $0x10] sm:$0xff] %v294
    %343 = vst [vmem:[#allocation2 + $0x18] sm:$0xff] %v296
    %344 = vst [vmem:[#allocation2 + $0x20] sm:$0xff] %v187
    %345 = vst [vmem:[#allocation2 + $0x28] sm:$0xff] %v189
    %346 = vst [vmem:[#allocation2 + $0x30] sm:$0xff] %v300
    %347 = vst [vmem:[#allocation2 + $0x38] sm:$0xff] %v302
    %348 = vst [vmem:[#allocation2 + $0x40] sm:$0xff] %v193
    %349 = vst [vmem:[#allocation2 + $0x48] sm:$0xff] %v195
    %350 = vst [vmem:[#allocation2 + $0x50] sm:$0xff] %v306
    %351 = vst [vmem:[#allocation2 + $0x58] sm:$0xff] %v308
    %352 = vst [vmem:[#allocation2 + $0x60] sm:$0xff] %v199
    %353 = vst [vmem:[#allocation2 + $0x68] sm:$0xff] %v201
    %354 = vst [vmem:[#allocation2 + $0x70] sm:$0xff] %v312
    %355 = vst [vmem:[#allocation2 + $0x78] sm:$0xff] %v314
    %356 = vst [vmem:[#allocation2 + $0x80] sm:$0xff] %v205
    %357 = vst [vmem:[#allocation2 + $0x88] sm:$0xff] %v207
    %358 = vst [vmem:[#allocation2 + $0x90] sm:$0xff] %v318
    %359 = vst [vmem:[#allocation2 + $0x98] sm:$0xff] %v320
    %360 = vst [vmem:[#allocation2 + $0xa0] sm:$0xff] %v211
    %361 = vst [vmem:[#allocation2 + $0xa8] sm:$0xff] %v213
    %362 = vst [vmem:[#allocation2 + $0xb0] sm:$0xff] %v324
    %363 = vst [vmem:[#allocation2 + $0xb8] sm:$0xff] %v326
    %364 = vst [vmem:[#allocation2 + $0xc0] sm:$0xff] %v217
    %365 = vst [vmem:[#allocation2 + $0xc8] sm:$0xff] %v219
    %366 = vst [vmem:[#allocation2 + $0xd0] sm:$0xff] %v330
    %367 = vst [vmem:[#allocation2 + $0xd8] sm:$0xff] %v332
    %368 = vst [vmem:[#allocation2 + $0xe0] sm:$0xff] %v223
    %369 = vst [vmem:[#allocation2 + $0xe8] sm:$0xff] %v225
    %370 = vst [vmem:[#allocation2 + $0xf0] sm:$0xff] %v336
    %371 = vst [vmem:[#allocation2 + $0xf8] sm:$0xff] %v338
    %v372 = vld [vmem:[#allocation3] sm:$0xff]
    %v373 = vld [vmem:[#allocation3 + $0x8] sm:$0xff]
    %v374 = vld [vmem:[#allocation3 + $0x10] sm:$0xff]
    %v375 = vld [vmem:[#allocation3 + $0x18] sm:$0xff]
    %v376 = vld [vmem:[#allocation3 + $0x20] sm:$0xff]
    %v377 = vld [vmem:[#allocation3 + $0x28] sm:$0xff]
    %v378 = vld [vmem:[#allocation3 + $0x30] sm:$0xff]
    %v379 = vld [vmem:[#allocation3 + $0x38] sm:$0xff]
    %v380 = vld [vmem:[#allocation3 + $0x40] sm:$0xff]
    %v381 = vld [vmem:[#allocation3 + $0x48] sm:$0xff]
    %v382 = vld [vmem:[#allocation3 + $0x50] sm:$0xff]
    %v383 = vld [vmem:[#allocation3 + $0x58] sm:$0xff]
    %v384 = vld [vmem:[#allocation3 + $0x60] sm:$0xff]
    %v385 = vld [vmem:[#allocation3 + $0x68] sm:$0xff]
    %v386 = vld [vmem:[#allocation3 + $0x70] sm:$0xff]
    %v387 = vld [vmem:[#allocation3 + $0x78] sm:$0xff]
    %v388 = vld [vmem:[#allocation3 + $0x80] sm:$0xff]
    %v389 = vld [vmem:[#allocation3 + $0x88] sm:$0xff]
    %v390 = vld [vmem:[#allocation3 + $0x90] sm:$0xff]
    %v391 = vld [vmem:[#allocation3 + $0x98] sm:$0xff]
    %v392 = vld [vmem:[#allocation3 + $0xa0] sm:$0xff]
    %v393 = vld [vmem:[#allocation3 + $0xa8] sm:$0xff]
    %v394 = vld [vmem:[#allocation3 + $0xb0] sm:$0xff]
    %v395 = vld [vmem:[#allocation3 + $0xb8] sm:$0xff]
    %v396 = vld [vmem:[#allocation3 + $0xc0] sm:$0xff]
    %v397 = vld [vmem:[#allocation3 + $0xc8] sm:$0xff]
    %v398 = vld [vmem:[#allocation3 + $0xd0] sm:$0xff]
    %v399 = vld [vmem:[#allocation3 + $0xd8] sm:$0xff]
    %v400 = vld [vmem:[#allocation3 + $0xe0] sm:$0xff]
    %v401 = vld [vmem:[#allocation3 + $0xe8] sm:$0xff]
    %v402 = vld [vmem:[#allocation3 + $0xf0] sm:$0xff]
    %v403 = vld [vmem:[#allocation3 + $0xf8] sm:$0xff]
    %v404 = vld [vmem:[#allocation3 + $0x100] sm:$0xff]
    %v405 = vld [vmem:[#allocation3 + $0x108] sm:$0xff]
    %v406 = vld [vmem:[#allocation3 + $0x110] sm:$0xff]
    %v407 = vld [vmem:[#allocation3 + $0x118] sm:$0xff]
    %v408 = vld [vmem:[#allocation3 + $0x120] sm:$0xff]
    %v409 = vld [vmem:[#allocation3 + $0x128] sm:$0xff]
    %v410 = vld [vmem:[#allocation3 + $0x130] sm:$0xff]
    %v411 = vld [vmem:[#allocation3 + $0x138] sm:$0xff]
    %v412 = vld [vmem:[#allocation3 + $0x140] sm:$0xff]
    %v413 = vld [vmem:[#allocation3 + $0x148] sm:$0xff]
    %v414 = vld [vmem:[#allocation3 + $0x150] sm:$0xff]
    %v415 = vld [vmem:[#allocation3 + $0x158] sm:$0xff]
    %v416 = vld [vmem:[#allocation3 + $0x160] sm:$0xff]
    %v417 = vld [vmem:[#allocation3 + $0x168] sm:$0xff]
    %v418 = vld [vmem:[#allocation3 + $0x170] sm:$0xff]
    %v419 = vld [vmem:[#allocation3 + $0x178] sm:$0xff]
    %v420 = vld [vmem:[#allocation3 + $0x180] sm:$0xff]
    %v421 = vld [vmem:[#allocation3 + $0x188] sm:$0xff]
    %v422 = vld [vmem:[#allocation3 + $0x190] sm:$0xff]
    %v423 = vld [vmem:[#allocation3 + $0x198] sm:$0xff]
    %v424 = vld [vmem:[#allocation3 + $0x1a0] sm:$0xff]
    %v425 = vld [vmem:[#allocation3 + $0x1a8] sm:$0xff]
    %v426 = vld [vmem:[#allocation3 + $0x1b0] sm:$0xff]
    %v427 = vld [vmem:[#allocation3 + $0x1b8] sm:$0xff]
    %v428 = vld [vmem:[#allocation3 + $0x1c0] sm:$0xff]
    %v429 = vld [vmem:[#allocation3 + $0x1c8] sm:$0xff]
    %v430 = vld [vmem:[#allocation3 + $0x1d0] sm:$0xff]
    %v431 = vld [vmem:[#allocation3 + $0x1d8] sm:$0xff]
    %v432 = vld [vmem:[#allocation3 + $0x1e0] sm:$0xff]
    %v433 = vld [vmem:[#allocation3 + $0x1e8] sm:$0xff]
    %v434 = vld [vmem:[#allocation3 + $0x1f0] sm:$0xff]
    %v435 = vld [vmem:[#allocation3 + $0x1f8] sm:$0xff]
    %s436 = smul.u32 0, 4
    %s437 = smul.addr %s436, 8
    %s438 = scalar_lea.vmem [#allocation2], %s437
    %v439 = vld [vmem:[%s438] sm:$0xff]
    %v440 = vld [vmem:[%s438 + $0x8] sm:$0xff]
    %v441 = vld [vmem:[%s438 + $0x10] sm:$0xff]
    %v442 = vld [vmem:[%s438 + $0x18] sm:$0xff]
    %443 = vmatprep.subr.mxu0 %v373
    %444 = vmatpush1.msra.mxu0 %v372
    %445 = vmatprep.subr.mxu0 %v377
    %446 = vmatpush1.msra.mxu0 %v376
    %447 = vmatprep.subr.mxu0 %v381
    %448 = vmatpush1.msra.mxu0 %v380
    %449 = vmatprep.subr.mxu0 %v385
    %450 = vmatpush1.msra.mxu0 %v384
    %451 = vmatprep.subr.mxu0 %v389
    %452 = vmatpush1.msra.mxu0 %v388
    %453 = vmatprep.subr.mxu0 %v393
    %454 = vmatpush1.msra.mxu0 %v392
    %455 = vmatprep.subr.mxu0 %v397
    %456 = vmatpush1.msra.mxu0 %v396
    %457 = vmatprep.subr.mxu0 %v401
    %458 = vmatpush1.msra.mxu0 %v400
    %459 = vmatprep.subr.mxu0 %v405
    %460 = vmatpush1.msra.mxu0 %v404
    %461 = vmatprep.subr.mxu0 %v409
    %462 = vmatpush1.msra.mxu0 %v408
    %463 = vmatprep.subr.mxu0 %v413
    %464 = vmatpush1.msra.mxu0 %v412
    %465 = vmatprep.subr.mxu0 %v417
    %466 = vmatpush1.msra.mxu0 %v416
    %467 = vmatprep.subr.mxu0 %v421
    %468 = vmatpush1.msra.mxu0 %v420
    %469 = vmatprep.subr.mxu0 %v425
    %470 = vmatpush1.msra.mxu0 %v424
    %471 = vmatprep.subr.mxu0 %v429
    %472 = vmatpush1.msra.mxu0 %v428
    %473 = vmatprep.subr.mxu0 %v433
    %474 = vmatpush1.msra.mxu0 %v432
    %475 = vmatprep.subr.mxu0 0.0
    %476 = vmatpush1.msra.mxu0 0.0
    %477 = vmatprep.subr.mxu0 0.0
    %478 = vmatpush1.msra.mxu0 0.0
    %479 = vmatprep.subr.mxu0 0.0
    %480 = vmatpush1.msra.mxu0 0.0
    %481 = vmatprep.subr.mxu0 0.0
    %482 = vmatpush1.msra.mxu0 0.0
    %483 = vmatprep.subr.mxu0 0.0
    %484 = vmatpush1.msra.mxu0 0.0
    %485 = vmatprep.subr.mxu0 0.0
    %486 = vmatpush1.msra.mxu0 0.0
    %487 = vmatprep.subr.mxu0 0.0
    %488 = vmatpush1.msra.mxu0 0.0
    %489 = vmatprep.subr.mxu0 0.0
    %490 = vmatpush1.msra.mxu0 0.0
    %491 = vmatprep.subr.mxu0 0.0
    %492 = vmatpush1.msra.mxu0 0.0
    %493 = vmatprep.subr.mxu0 0.0
    %494 = vmatpush1.msra.mxu0 0.0
    %495 = vmatprep.subr.mxu0 0.0
    %496 = vmatpush1.msra.mxu0 0.0
    %497 = vmatprep.subr.mxu0 0.0
    %498 = vmatpush1.msra.mxu0 0.0
    %499 = vmatprep.subr.mxu0 0.0
    %500 = vmatpush1.msra.mxu0 0.0
    %501 = vmatprep.subr.mxu0 0.0
    %502 = vmatpush1.msra.mxu0 0.0
    %503 = vmatprep.subr.mxu0 0.0
    %504 = vmatpush1.msra.mxu0 0.0
    %505 = vmatprep.subr.mxu0 0.0
    %506 = vmatpush1.msra.mxu0 0.0
    %507 = vmatprep.mubr.f32.mxu0 0.0
    %508 = vmatmul.mubr.f32.gmra.mrb[0].mxu0 0.0
    %v509 = vpop.f32.mrb[0].mxu0
    %v510 = vadd.f32 %v439, %v509
    %v511 = vpop.f32.mrb[0].mxu0
    %v512 = vadd.f32 %v440, %v511
    %513 = vdwg.mxu0
    %514 = vmatprep.subr.mxu0 %v375
    %515 = vmatpush1.msra.mxu0 %v374
    %516 = vmatprep.subr.mxu0 %v379
    %517 = vmatpush1.msra.mxu0 %v378
    %518 = vmatprep.subr.mxu0 %v383
    %519 = vmatpush1.msra.mxu0 %v382
    %520 = vmatprep.subr.mxu0 %v387
    %521 = vmatpush1.msra.mxu0 %v386
    %522 = vmatprep.subr.mxu0 %v391
    %523 = vmatpush1.msra.mxu0 %v390
    %524 = vmatprep.subr.mxu0 %v395
    %525 = vmatpush1.msra.mxu0 %v394
    %526 = vmatprep.subr.mxu0 %v399
    %527 = vmatpush1.msra.mxu0 %v398
    %528 = vmatprep.subr.mxu0 %v403
    %529 = vmatpush1.msra.mxu0 %v402
    %530 = vmatprep.subr.mxu0 %v407
    %531 = vmatpush1.msra.mxu0 %v406
    %532 = vmatprep.subr.mxu0 %v411
    %533 = vmatpush1.msra.mxu0 %v410
    %534 = vmatprep.subr.mxu0 %v415
    %535 = vmatpush1.msra.mxu0 %v414
    %536 = vmatprep.subr.mxu0 %v419
    %537 = vmatpush1.msra.mxu0 %v418
    %538 = vmatprep.subr.mxu0 %v423
    %539 = vmatpush1.msra.mxu0 %v422
    %540 = vmatprep.subr.mxu0 %v427
    %541 = vmatpush1.msra.mxu0 %v426
    %542 = vmatprep.subr.mxu0 %v431
    %543 = vmatpush1.msra.mxu0 %v430
    %544 = vmatprep.subr.mxu0 %v435
    %545 = vmatpush1.msra.mxu0 %v434
    %546 = vmatprep.subr.mxu0 0.0
    %547 = vmatpush1.msra.mxu0 0.0
    %548 = vmatprep.subr.mxu0 0.0
    %549 = vmatpush1.msra.mxu0 0.0
    %550 = vmatprep.subr.mxu0 0.0
    %551 = vmatpush1.msra.mxu0 0.0
    %552 = vmatprep.subr.mxu0 0.0
    %553 = vmatpush1.msra.mxu0 0.0
    %554 = vmatprep.subr.mxu0 0.0
    %555 = vmatpush1.msra.mxu0 0.0
    %556 = vmatprep.subr.mxu0 0.0
    %557 = vmatpush1.msra.mxu0 0.0
    %558 = vmatprep.subr.mxu0 0.0
    %559 = vmatpush1.msra.mxu0 0.0
    %560 = vmatprep.subr.mxu0 0.0
    %561 = vmatpush1.msra.mxu0 0.0
    %562 = vmatprep.subr.mxu0 0.0
    %563 = vmatpush1.msra.mxu0 0.0
    %564 = vmatprep.subr.mxu0 0.0
    %565 = vmatpush1.msra.mxu0 0.0
    %566 = vmatprep.subr.mxu0 0.0
    %567 = vmatpush1.msra.mxu0 0.0
    %568 = vmatprep.subr.mxu0 0.0
    %569 = vmatpush1.msra.mxu0 0.0
    %570 = vmatprep.subr.mxu0 0.0
    %571 = vmatpush1.msra.mxu0 0.0
    %572 = vmatprep.subr.mxu0 0.0
    %573 = vmatpush1.msra.mxu0 0.0
    %574 = vmatprep.subr.mxu0 0.0
    %575 = vmatpush1.msra.mxu0 0.0
    %576 = vmatprep.subr.mxu0 0.0
    %577 = vmatpush1.msra.mxu0 0.0
    %578 = vmatprep.mubr.f32.mxu0 0.0
    %579 = vmatmul.mubr.f32.gmra.mrb[0].mxu0 0.0
    %v580 = vpop.f32.mrb[0].mxu0
    %v581 = vadd.f32 %v441, %v580
    %v582 = vpop.f32.mrb[0].mxu0
    %v583 = vadd.f32 %v442, %v582
    %584 = vdwg.mxu0
    %v585 = vmul.f32 %v510, 0.5
    %v586 = vmul.f32 %v512, 0.5
    %v587 = vmul.f32 %v581, 0.5
    %v588 = vtanh.pop %v585
    %v589 = vtanh.pop %v586
    %v590 = vtanh.pop %v587
    %v591 = vadd.f32 %v588, 1.0
    %v592 = vadd.f32 %v589, 1.0
    %v593 = vadd.f32 %v590, 1.0
    %v594 = vmul.f32 %v591, 0.5
    %v595 = vmul.f32 %v592, 0.5
    %v596 = vmul.f32 %v593, 0.5
    %v597 = vtanh.pop %v583
    %v598 = vmul.f32 %v595, 0.0
    %v599 = vmul.f32 %v594, %v597
    %v600 = vadd.f32 %v598, %v599
    %v601 = vtanh.pop %v600
    %v602 = vmul.f32 %v596, %v601
    %s603 = smul.u32 1, 4
    %s604 = smul.addr %s603, 8
    %s605 = scalar_lea.vmem [#allocation2], %s604
    %v606 = vld [vmem:[%s605] sm:$0xff]
    %v607 = vld [vmem:[%s605 + $0x8] sm:$0xff]
    %v608 = vld [vmem:[%s605 + $0x10] sm:$0xff]
    %v609 = vld [vmem:[%s605 + $0x18] sm:$0xff]
    %610 = vmatprep.subr.mxu0 %v373
    %611 = vmatpush1.msra.mxu0 %v372
    %612 = vmatprep.subr.mxu0 %v377
    %613 = vmatpush1.msra.mxu0 %v376
    %614 = vmatprep.subr.mxu0 %v381
    %615 = vmatpush1.msra.mxu0 %v380
    %616 = vmatprep.subr.mxu0 %v385
    %617 = vmatpush1.msra.mxu0 %v384
    %618 = vmatprep.subr.mxu0 %v389
    %619 = vmatpush1.msra.mxu0 %v388
    %620 = vmatprep.subr.mxu0 %v393
    %621 = vmatpush1.msra.mxu0 %v392
    %622 = vmatprep.subr.mxu0 %v397
    %623 = vmatpush1.msra.mxu0 %v396
    %624 = vmatprep.subr.mxu0 %v401
    %625 = vmatpush1.msra.mxu0 %v400
    %626 = vmatprep.subr.mxu0 %v405
    %627 = vmatpush1.msra.mxu0 %v404
    %628 = vmatprep.subr.mxu0 %v409
    %629 = vmatpush1.msra.mxu0 %v408
    %630 = vmatprep.subr.mxu0 %v413
    %631 = vmatpush1.msra.mxu0 %v412
    %632 = vmatprep.subr.mxu0 %v417
    %633 = vmatpush1.msra.mxu0 %v416
    %634 = vmatprep.subr.mxu0 %v421
    %635 = vmatpush1.msra.mxu0 %v420
    %636 = vmatprep.subr.mxu0 %v425
    %637 = vmatpush1.msra.mxu0 %v424
    %638 = vmatprep.subr.mxu0 %v429
    %639 = vmatpush1.msra.mxu0 %v428
    %640 = vmatprep.subr.mxu0 %v433
    %641 = vmatpush1.msra.mxu0 %v432
    %642 = vmatprep.subr.mxu0 0.0
    %643 = vmatpush1.msra.mxu0 0.0
    %644 = vmatprep.subr.mxu0 0.0
    %645 = vmatpush1.msra.mxu0 0.0
    %646 = vmatprep.subr.mxu0 0.0
    %647 = vmatpush1.msra.mxu0 0.0
    %648 = vmatprep.subr.mxu0 0.0
    %649 = vmatpush1.msra.mxu0 0.0
    %650 = vmatprep.subr.mxu0 0.0
    %651 = vmatpush1.msra.mxu0 0.0
    %652 = vmatprep.subr.mxu0 0.0
    %653 = vmatpush1.msra.mxu0 0.0
    %654 = vmatprep.subr.mxu0 0.0
    %655 = vmatpush1.msra.mxu0 0.0
    %656 = vmatprep.subr.mxu0 0.0
    %657 = vmatpush1.msra.mxu0 0.0
    %658 = vmatprep.subr.mxu0 0.0
    %659 = vmatpush1.msra.mxu0 0.0
    %660 = vmatprep.subr.mxu0 0.0
    %661 = vmatpush1.msra.mxu0 0.0
    %662 = vmatprep.subr.mxu0 0.0
    %663 = vmatpush1.msra.mxu0 0.0
    %664 = vmatprep.subr.mxu0 0.0
    %665 = vmatpush1.msra.mxu0 0.0
    %666 = vmatprep.subr.mxu0 0.0
    %667 = vmatpush1.msra.mxu0 0.0
    %668 = vmatprep.subr.mxu0 0.0
    %669 = vmatpush1.msra.mxu0 0.0
    %670 = vmatprep.subr.mxu0 0.0
    %671 = vmatpush1.msra.mxu0 0.0
    %672 = vmatprep.subr.mxu0 0.0
    %673 = vmatpush1.msra.mxu0 0.0
    %674 = vmatprep.mubr.f32.mxu0 0.0
    %675 = vmatmul.mubr.f32.gmra.mrb[0].mxu0 %v602
    %v676 = vpop.f32.mrb[0].mxu0
    %v677 = vadd.f32 %v606, %v676
    %v678 = vpop.f32.mrb[0].mxu0
    %v679 = vadd.f32 %v607, %v678
    %680 = vdwg.mxu0
    %681 = vmatprep.subr.mxu0 %v375
    %682 = vmatpush1.msra.mxu0 %v374
    %683 = vmatprep.subr.mxu0 %v379
    %684 = vmatpush1.msra.mxu0 %v378
    %685 = vmatprep.subr.mxu0 %v383
    %686 = vmatpush1.msra.mxu0 %v382
    %687 = vmatprep.subr.mxu0 %v387
    %688 = vmatpush1.msra.mxu0 %v386
    %689 = vmatprep.subr.mxu0 %v391
    %690 = vmatpush1.msra.mxu0 %v390
    %691 = vmatprep.subr.mxu0 %v395
    %692 = vmatpush1.msra.mxu0 %v394
    %693 = vmatprep.subr.mxu0 %v399
    %694 = vmatpush1.msra.mxu0 %v398
    %695 = vmatprep.subr.mxu0 %v403
    %696 = vmatpush1.msra.mxu0 %v402
    %697 = vmatprep.subr.mxu0 %v407
    %698 = vmatpush1.msra.mxu0 %v406
    %699 = vmatprep.subr.mxu0 %v411
    %700 = vmatpush1.msra.mxu0 %v410
    %701 = vmatprep.subr.mxu0 %v415
    %702 = vmatpush1.msra.mxu0 %v414
    %703 = vmatprep.subr.mxu0 %v419
    %704 = vmatpush1.msra.mxu0 %v418
    %705 = vmatprep.subr.mxu0 %v423
    %706 = vmatpush1.msra.mxu0 %v422
    %707 = vmatprep.subr.mxu0 %v427
    %708 = vmatpush1.msra.mxu0 %v426
    %709 = vmatprep.subr.mxu0 %v431
    %710 = vmatpush1.msra.mxu0 %v430
    %711 = vmatprep.subr.mxu0 %v435
    %712 = vmatpush1.msra.mxu0 %v434
    %713 = vmatprep.subr.mxu0 0.0
    %714 = vmatpush1.msra.mxu0 0.0
    %715 = vmatprep.subr.mxu0 0.0
    %716 = vmatpush1.msra.mxu0 0.0
    %717 = vmatprep.subr.mxu0 0.0
    %718 = vmatpush1.msra.mxu0 0.0
    %719 = vmatprep.subr.mxu0 0.0
    %720 = vmatpush1.msra.mxu0 0.0
    %721 = vmatprep.subr.mxu0 0.0
    %722 = vmatpush1.msra.mxu0 0.0
    %723 = vmatprep.subr.mxu0 0.0
    %724 = vmatpush1.msra.mxu0 0.0
    %725 = vmatprep.subr.mxu0 0.0
    %726 = vmatpush1.msra.mxu0 0.0
    %727 = vmatprep.subr.mxu0 0.0
    %728 = vmatpush1.msra.mxu0 0.0
    %729 = vmatprep.subr.mxu0 0.0
    %730 = vmatpush1.msra.mxu0 0.0
    %731 = vmatprep.subr.mxu0 0.0
    %732 = vmatpush1.msra.mxu0 0.0
    %733 = vmatprep.subr.mxu0 0.0
    %734 = vmatpush1.msra.mxu0 0.0
    %735 = vmatprep.subr.mxu0 0.0
    %736 = vmatpush1.msra.mxu0 0.0
    %737 = vmatprep.subr.mxu0 0.0
    %738 = vmatpush1.msra.mxu0 0.0
    %739 = vmatprep.subr.mxu0 0.0
    %740 = vmatpush1.msra.mxu0 0.0
    %741 = vmatprep.subr.mxu0 0.0
    %742 = vmatpush1.msra.mxu0 0.0
    %743 = vmatprep.subr.mxu0 0.0
    %744 = vmatpush1.msra.mxu0 0.0
    %745 = vmatprep.mubr.f32.mxu0 0.0
    %746 = vmatmul.mubr.f32.gmra.mrb[0].mxu0 %v602
    %v747 = vpop.f32.mrb[0].mxu0
    %v748 = vadd.f32 %v608, %v747
    %v749 = vpop.f32.mrb[0].mxu0
    %v750 = vadd.f32 %v609, %v749
    %751 = vdwg.mxu0
    %v752 = vmul.f32 %v677, 0.5
    %v753 = vmul.f32 %v679, 0.5
    %v754 = vmul.f32 %v748, 0.5
    %v755 = vtanh.pop %v752
    %v756 = vtanh.pop %v753
    %v757 = vtanh.pop %v754
    %v758 = vadd.f32 %v755, 1.0
    %v759 = vadd.f32 %v756, 1.0
    %v760 = vadd.f32 %v757, 1.0
    %v761 = vmul.f32 %v758, 0.5
    %v762 = vmul.f32 %v759, 0.5
    %v763 = vmul.f32 %v760, 0.5
    %v764 = vtanh.pop %v750
    %v765 = vmul.f32 %v762, %v600
    %v766 = vmul.f32 %v761, %v764
    %v767 = vadd.f32 %v765, %v766
    %v768 = vtanh.pop %v767
    %v769 = vmul.f32 %v763, %v768
    %s770 = smul.u32 2, 4
    %s771 = smul.addr %s770, 8
    %s772 = scalar_lea.vmem [#allocation2], %s771
    %v773 = vld [vmem:[%s772] sm:$0xff]
    %v774 = vld [vmem:[%s772 + $0x8] sm:$0xff]
    %v775 = vld [vmem:[%s772 + $0x10] sm:$0xff]
    %v776 = vld [vmem:[%s772 + $0x18] sm:$0xff]
    %777 = vmatprep.subr.mxu0 %v373
    %778 = vmatpush1.msra.mxu0 %v372
    %779 = vmatprep.subr.mxu0 %v377
    %780 = vmatpush1.msra.mxu0 %v376
    %781 = vmatprep.subr.mxu0 %v381
    %782 = vmatpush1.msra.mxu0 %v380
    %783 = vmatprep.subr.mxu0 %v385
    %784 = vmatpush1.msra.mxu0 %v384
    %785 = vmatprep.subr.mxu0 %v389
    %786 = vmatpush1.msra.mxu0 %v388
    %787 = vmatprep.subr.mxu0 %v393
    %788 = vmatpush1.msra.mxu0 %v392
    %789 = vmatprep.subr.mxu0 %v397
    %790 = vmatpush1.msra.mxu0 %v396
    %791 = vmatprep.subr.mxu0 %v401
    %792 = vmatpush1.msra.mxu0 %v400
    %793 = vmatprep.subr.mxu0 %v405
    %794 = vmatpush1.msra.mxu0 %v404
    %795 = vmatprep.subr.mxu0 %v409
    %796 = vmatpush1.msra.mxu0 %v408
    %797 = vmatprep.subr.mxu0 %v413
    %798 = vmatpush1.msra.mxu0 %v412
    %799 = vmatprep.subr.mxu0 %v417
    %800 = vmatpush1.msra.mxu0 %v416
    %801 = vmatprep.subr.mxu0 %v421
    %802 = vmatpush1.msra.mxu0 %v420
    %803 = vmatprep.subr.mxu0 %v425
    %804 = vmatpush1.msra.mxu0 %v424
    %805 = vmatprep.subr.mxu0 %v429
    %806 = vmatpush1.msra.mxu0 %v428
    %807 = vmatprep.subr.mxu0 %v433
    %808 = vmatpush1.msra.mxu0 %v432
    %809 = vmatprep.subr.mxu0 0.0
    %810 = vmatpush1.msra.mxu0 0.0
    %811 = vmatprep.subr.mxu0 0.0
    %812 = vmatpush1.msra.mxu0 0.0
    %813 = vmatprep.subr.mxu0 0.0
    %814 = vmatpush1.msra.mxu0 0.0
    %815 = vmatprep.subr.mxu0 0.0
    %816 = vmatpush1.msra.mxu0 0.0
    %817 = vmatprep.subr.mxu0 0.0
    %818 = vmatpush1.msra.mxu0 0.0
    %819 = vmatprep.subr.mxu0 0.0
    %820 = vmatpush1.msra.mxu0 0.0
    %821 = vmatprep.subr.mxu0 0.0
    %822 = vmatpush1.msra.mxu0 0.0
    %823 = vmatprep.subr.mxu0 0.0
    %824 = vmatpush1.msra.mxu0 0.0
    %825 = vmatprep.subr.mxu0 0.0
    %826 = vmatpush1.msra.mxu0 0.0
    %827 = vmatprep.subr.mxu0 0.0
    %828 = vmatpush1.msra.mxu0 0.0
    %829 = vmatprep.subr.mxu0 0.0
    %830 = vmatpush1.msra.mxu0 0.0
    %831 = vmatprep.subr.mxu0 0.0
    %832 = vmatpush1.msra.mxu0 0.0
    %833 = vmatprep.subr.mxu0 0.0
    %834 = vmatpush1.msra.mxu0 0.0
    %835 = vmatprep.subr.mxu0 0.0
    %836 = vmatpush1.msra.mxu0 0.0
    %837 = vmatprep.subr.mxu0 0.0
    %838 = vmatpush1.msra.mxu0 0.0
    %839 = vmatprep.subr.mxu0 0.0
    %840 = vmatpush1.msra.mxu0 0.0
    %841 = vmatprep.mubr.f32.mxu0 0.0
    %842 = vmatmul.mubr.f32.gmra.mrb[0].mxu0 %v769
    %v843 = vpop.f32.mrb[0].mxu0
    %v844 = vadd.f32 %v773, %v843
    %v845 = vpop.f32.mrb[0].mxu0
    %v846 = vadd.f32 %v774, %v845
    %847 = vdwg.mxu0
    %848 = vmatprep.subr.mxu0 %v375
    %849 = vmatpush1.msra.mxu0 %v374
    %850 = vmatprep.subr.mxu0 %v379
    %851 = vmatpush1.msra.mxu0 %v378
    %852 = vmatprep.subr.mxu0 %v383
    %853 = vmatpush1.msra.mxu0 %v382
    %854 = vmatprep.subr.mxu0 %v387
    %855 = vmatpush1.msra.mxu0 %v386
    %856 = vmatprep.subr.mxu0 %v391
    %857 = vmatpush1.msra.mxu0 %v390
    %858 = vmatprep.subr.mxu0 %v395
    %859 = vmatpush1.msra.mxu0 %v394
    %860 = vmatprep.subr.mxu0 %v399
    %861 = vmatpush1.msra.mxu0 %v398
    %862 = vmatprep.subr.mxu0 %v403
    %863 = vmatpush1.msra.mxu0 %v402
    %864 = vmatprep.subr.mxu0 %v407
    %865 = vmatpush1.msra.mxu0 %v406
    %866 = vmatprep.subr.mxu0 %v411
    %867 = vmatpush1.msra.mxu0 %v410
    %868 = vmatprep.subr.mxu0 %v415
    %869 = vmatpush1.msra.mxu0 %v414
    %870 = vmatprep.subr.mxu0 %v419
    %871 = vmatpush1.msra.mxu0 %v418
    %872 = vmatprep.subr.mxu0 %v423
    %873 = vmatpush1.msra.mxu0 %v422
    %874 = vmatprep.subr.mxu0 %v427
    %875 = vmatpush1.msra.mxu0 %v426
    %876 = vmatprep.subr.mxu0 %v431
    %877 = vmatpush1.msra.mxu0 %v430
    %878 = vmatprep.subr.mxu0 %v435
    %879 = vmatpush1.msra.mxu0 %v434
    %880 = vmatprep.subr.mxu0 0.0
    %881 = vmatpush1.msra.mxu0 0.0
    %882 = vmatprep.subr.mxu0 0.0
    %883 = vmatpush1.msra.mxu0 0.0
    %884 = vmatprep.subr.mxu0 0.0
    %885 = vmatpush1.msra.mxu0 0.0
    %886 = vmatprep.subr.mxu0 0.0
    %887 = vmatpush1.msra.mxu0 0.0
    %888 = vmatprep.subr.mxu0 0.0
    %889 = vmatpush1.msra.mxu0 0.0
    %890 = vmatprep.subr.mxu0 0.0
    %891 = vmatpush1.msra.mxu0 0.0
    %892 = vmatprep.subr.mxu0 0.0
    %893 = vmatpush1.msra.mxu0 0.0
    %894 = vmatprep.subr.mxu0 0.0
    %895 = vmatpush1.msra.mxu0 0.0
    %896 = vmatprep.subr.mxu0 0.0
    %897 = vmatpush1.msra.mxu0 0.0
    %898 = vmatprep.subr.mxu0 0.0
    %899 = vmatpush1.msra.mxu0 0.0
    %900 = vmatprep.subr.mxu0 0.0
    %901 = vmatpush1.msra.mxu0 0.0
    %902 = vmatprep.subr.mxu0 0.0
    %903 = vmatpush1.msra.mxu0 0.0
    %904 = vmatprep.subr.mxu0 0.0
    %905 = vmatpush1.msra.mxu0 0.0
    %906 = vmatprep.subr.mxu0 0.0
    %907 = vmatpush1.msra.mxu0 0.0
    %908 = vmatprep.subr.mxu0 0.0
    %909 = vmatpush1.msra.mxu0 0.0
    %910 = vmatprep.subr.mxu0 0.0
    %911 = vmatpush1.msra.mxu0 0.0
    %912 = vmatprep.mubr.f32.mxu0 0.0
    %913 = vmatmul.mubr.f32.gmra.mrb[0].mxu0 %v769
    %v914 = vpop.f32.mrb[0].mxu0
    %v915 = vadd.f32 %v775, %v914
    %v916 = vpop.f32.mrb[0].mxu0
    %v917 = vadd.f32 %v776, %v916
    %918 = vdwg.mxu0
    %v919 = vmul.f32 %v844, 0.5
    %v920 = vmul.f32 %v846, 0.5
    %v921 = vmul.f32 %v915, 0.5
    %v922 = vtanh.pop %v919
    %v923 = vtanh.pop %v920
    %v924 = vtanh.pop %v921
    %v925 = vadd.f32 %v922, 1.0
    %v926 = vadd.f32 %v923, 1.0
    %v927 = vadd.f32 %v924, 1.0
    %v928 = vmul.f32 %v925, 0.5
    %v929 = vmul.f32 %v926, 0.5
    %v930 = vmul.f32 %v927, 0.5
    %v931 = vtanh.pop %v917
    %v932 = vmul.f32 %v929, %v767
    %v933 = vmul.f32 %v928, %v931
    %v934 = vadd.f32 %v932, %v933
    %v935 = vtanh.pop %v934
    %v936 = vmul.f32 %v930, %v935
    %s937 = smul.u32 3, 4
    %s938 = smul.addr %s937, 8
    %s939 = scalar_lea.vmem [#allocation2], %s938
    %v940 = vld [vmem:[%s939] sm:$0xff]
    %v941 = vld [vmem:[%s939 + $0x8] sm:$0xff]
    %v942 = vld [vmem:[%s939 + $0x10] sm:$0xff]
    %v943 = vld [vmem:[%s939 + $0x18] sm:$0xff]
    %944 = vmatprep.subr.mxu0 %v373
    %945 = vmatpush1.msra.mxu0 %v372
    %946 = vmatprep.subr.mxu0 %v377
    %947 = vmatpush1.msra.mxu0 %v376
    %948 = vmatprep.subr.mxu0 %v381
    %949 = vmatpush1.msra.mxu0 %v380
    %950 = vmatprep.subr.mxu0 %v385
    %951 = vmatpush1.msra.mxu0 %v384
    %952 = vmatprep.subr.mxu0 %v389
    %953 = vmatpush1.msra.mxu0 %v388
    %954 = vmatprep.subr.mxu0 %v393
    %955 = vmatpush1.msra.mxu0 %v392
    %956 = vmatprep.subr.mxu0 %v397
    %957 = vmatpush1.msra.mxu0 %v396
    %958 = vmatprep.subr.mxu0 %v401
    %959 = vmatpush1.msra.mxu0 %v400
    %960 = vmatprep.subr.mxu0 %v405
    %961 = vmatpush1.msra.mxu0 %v404
    %962 = vmatprep.subr.mxu0 %v409
    %963 = vmatpush1.msra.mxu0 %v408
    %964 = vmatprep.subr.mxu0 %v413
    %965 = vmatpush1.msra.mxu0 %v412
    %966 = vmatprep.subr.mxu0 %v417
    %967 = vmatpush1.msra.mxu0 %v416
    %968 = vmatprep.subr.mxu0 %v421
    %969 = vmatpush1.msra.mxu0 %v420
    %970 = vmatprep.subr.mxu0 %v425
    %971 = vmatpush1.msra.mxu0 %v424
    %972 = vmatprep.subr.mxu0 %v429
    %973 = vmatpush1.msra.mxu0 %v428
    %974 = vmatprep.subr.mxu0 %v433
    %975 = vmatpush1.msra.mxu0 %v432
    %976 = vmatprep.subr.mxu0 0.0
    %977 = vmatpush1.msra.mxu0 0.0
    %978 = vmatprep.subr.mxu0 0.0
    %979 = vmatpush1.msra.mxu0 0.0
    %980 = vmatprep.subr.mxu0 0.0
    %981 = vmatpush1.msra.mxu0 0.0
    %982 = vmatprep.subr.mxu0 0.0
    %983 = vmatpush1.msra.mxu0 0.0
    %984 = vmatprep.subr.mxu0 0.0
    %985 = vmatpush1.msra.mxu0 0.0
    %986 = vmatprep.subr.mxu0 0.0
    %987 = vmatpush1.msra.mxu0 0.0
    %988 = vmatprep.subr.mxu0 0.0
    %989 = vmatpush1.msra.mxu0 0.0
    %990 = vmatprep.subr.mxu0 0.0
    %991 = vmatpush1.msra.mxu0 0.0
    %992 = vmatprep.subr.mxu0 0.0
    %993 = vmatpush1.msra.mxu0 0.0
    %994 = vmatprep.subr.mxu0 0.0
    %995 = vmatpush1.msra.mxu0 0.0
    %996 = vmatprep.subr.mxu0 0.0
    %997 = vmatpush1.msra.mxu0 0.0
    %998 = vmatprep.subr.mxu0 0.0
    %999 = vmatpush1.msra.mxu0 0.0
    %1000 = vmatprep.subr.mxu0 0.0
    %1001 = vmatpush1.msra.mxu0 0.0
    %1002 = vmatprep.subr.mxu0 0.0
    %1003 = vmatpush1.msra.mxu0 0.0
    %1004 = vmatprep.subr.mxu0 0.0
    %1005 = vmatpush1.msra.mxu0 0.0
    %1006 = vmatprep.subr.mxu0 0.0
    %1007 = vmatpush1.msra.mxu0 0.0
    %1008 = vmatprep.mubr.f32.mxu0 0.0
    %1009 = vmatmul.mubr.f32.gmra.mrb[0].mxu0 %v936
    %v1010 = vpop.f32.mrb[0].mxu0
    %v1011 = vadd.f32 %v940, %v1010
    %v1012 = vpop.f32.mrb[0].mxu0
    %v1013 = vadd.f32 %v941, %v1012
    %1014 = vdwg.mxu0
    %1015 = vmatprep.subr.mxu0 %v375
    %1016 = vmatpush1.msra.mxu0 %v374
    %1017 = vmatprep.subr.mxu0 %v379
    %1018 = vmatpush1.msra.mxu0 %v378
    %1019 = vmatprep.subr.mxu0 %v383
    %1020 = vmatpush1.msra.mxu0 %v382
    %1021 = vmatprep.subr.mxu0 %v387
    %1022 = vmatpush1.msra.mxu0 %v386
    %1023 = vmatprep.subr.mxu0 %v391
    %1024 = vmatpush1.msra.mxu0 %v390
    %1025 = vmatprep.subr.mxu0 %v395
    %1026 = vmatpush1.msra.mxu0 %v394
    %1027 = vmatprep.subr.mxu0 %v399
    %1028 = vmatpush1.msra.mxu0 %v398
    %1029 = vmatprep.subr.mxu0 %v403
    %1030 = vmatpush1.msra.mxu0 %v402
    %1031 = vmatprep.subr.mxu0 %v407
    %1032 = vmatpush1.msra.mxu0 %v406
    %1033 = vmatprep.subr.mxu0 %v411
    %1034 = vmatpush1.msra.mxu0 %v410
    %1035 = vmatprep.subr.mxu0 %v415
    %1036 = vmatpush1.msra.mxu0 %v414
    %1037 = vmatprep.subr.mxu0 %v419
    %1038 = vmatpush1.msra.mxu0 %v418
    %1039 = vmatprep.subr.mxu0 %v423
    %1040 = vmatpush1.msra.mxu0 %v422
    %1041 = vmatprep.subr.mxu0 %v427
    %1042 = vmatpush1.msra.mxu0 %v426
    %1043 = vmatprep.subr.mxu0 %v431
    %1044 = vmatpush1.msra.mxu0 %v430
    %1045 = vmatprep.subr.mxu0 %v435
    %1046 = vmatpush1.msra.mxu0 %v434
    %1047 = vmatprep.subr.mxu0 0.0
    %1048 = vmatpush1.msra.mxu0 0.0
    %1049 = vmatprep.subr.mxu0 0.0
    %1050 = vmatpush1.msra.mxu0 0.0
    %1051 = vmatprep.subr.mxu0 0.0
    %1052 = vmatpush1.msra.mxu0 0.0
    %1053 = vmatprep.subr.mxu0 0.0
    %1054 = vmatpush1.msra.mxu0 0.0
    %1055 = vmatprep.subr.mxu0 0.0
    %1056 = vmatpush1.msra.mxu0 0.0
    %1057 = vmatprep.subr.mxu0 0.0
    %1058 = vmatpush1.msra.mxu0 0.0
    %1059 = vmatprep.subr.mxu0 0.0
    %1060 = vmatpush1.msra.mxu0 0.0
    %1061 = vmatprep.subr.mxu0 0.0
    %1062 = vmatpush1.msra.mxu0 0.0
    %1063 = vmatprep.subr.mxu0 0.0
    %1064 = vmatpush1.msra.mxu0 0.0
    %1065 = vmatprep.subr.mxu0 0.0
    %1066 = vmatpush1.msra.mxu0 0.0
    %1067 = vmatprep.subr.mxu0 0.0
    %1068 = vmatpush1.msra.mxu0 0.0
    %1069 = vmatprep.subr.mxu0 0.0
    %1070 = vmatpush1.msra.mxu0 0.0
    %1071 = vmatprep.subr.mxu0 0.0
    %1072 = vmatpush1.msra.mxu0 0.0
    %1073 = vmatprep.subr.mxu0 0.0
    %1074 = vmatpush1.msra.mxu0 0.0
    %1075 = vmatprep.subr.mxu0 0.0
    %1076 = vmatpush1.msra.mxu0 0.0
    %1077 = vmatprep.subr.mxu0 0.0
    %1078 = vmatpush1.msra.mxu0 0.0
    %1079 = vmatprep.mubr.f32.mxu0 0.0
    %1080 = vmatmul.mubr.f32.gmra.mrb[0].mxu0 %v936
    %v1081 = vpop.f32.mrb[0].mxu0
    %v1082 = vadd.f32 %v942, %v1081
    %v1083 = vpop.f32.mrb[0].mxu0
    %v1084 = vadd.f32 %v943, %v1083
    %1085 = vdwg.mxu0
    %v1086 = vmul.f32 %v1011, 0.5
    %v1087 = vmul.f32 %v1013, 0.5
    %v1088 = vmul.f32 %v1082, 0.5
    %v1089 = vtanh.pop %v1086
    %v1090 = vtanh.pop %v1087
    %v1091 = vtanh.pop %v1088
    %v1092 = vadd.f32 %v1089, 1.0
    %v1093 = vadd.f32 %v1090, 1.0
    %v1094 = vadd.f32 %v1091, 1.0
    %v1095 = vmul.f32 %v1092, 0.5
    %v1096 = vmul.f32 %v1093, 0.5
    %v1097 = vmul.f32 %v1094, 0.5
    %v1098 = vtanh.pop %v1084
    %v1099 = vmul.f32 %v1096, %v934
    %v1100 = vmul.f32 %v1095, %v1098
    %v1101 = vadd.f32 %v1099, %v1100
    %v1102 = vtanh.pop %v1101
    %v1103 = vmul.f32 %v1097, %v1102
    %s1104 = smul.u32 4, 4
    %s1105 = smul.addr %s1104, 8
    %s1106 = scalar_lea.vmem [#allocation2], %s1105
    %v1107 = vld [vmem:[%s1106] sm:$0xff]
    %v1108 = vld [vmem:[%s1106 + $0x8] sm:$0xff]
    %v1109 = vld [vmem:[%s1106 + $0x10] sm:$0xff]
    %v1110 = vld [vmem:[%s1106 + $0x18] sm:$0xff]
    %1111 = vmatprep.subr.mxu0 %v373
    %1112 = vmatpush1.msra.mxu0 %v372
    %1113 = vmatprep.subr.mxu0 %v377
    %1114 = vmatpush1.msra.mxu0 %v376
    %1115 = vmatprep.subr.mxu0 %v381
    %1116 = vmatpush1.msra.mxu0 %v380
    %1117 = vmatprep.subr.mxu0 %v385
    %1118 = vmatpush1.msra.mxu0 %v384
    %1119 = vmatprep.subr.mxu0 %v389
    %1120 = vmatpush1.msra.mxu0 %v388
    %1121 = vmatprep.subr.mxu0 %v393
    %1122 = vmatpush1.msra.mxu0 %v392
    %1123 = vmatprep.subr.mxu0 %v397
    %1124 = vmatpush1.msra.mxu0 %v396
    %1125 = vmatprep.subr.mxu0 %v401
    %1126 = vmatpush1.msra.mxu0 %v400
    %1127 = vmatprep.subr.mxu0 %v405
    %1128 = vmatpush1.msra.mxu0 %v404
    %1129 = vmatprep.subr.mxu0 %v409
    %1130 = vmatpush1.msra.mxu0 %v408
    %1131 = vmatprep.subr.mxu0 %v413
    %1132 = vmatpush1.msra.mxu0 %v412
    %1133 = vmatprep.subr.mxu0 %v417
    %1134 = vmatpush1.msra.mxu0 %v416
    %1135 = vmatprep.subr.mxu0 %v421
    %1136 = vmatpush1.msra.mxu0 %v420
    %1137 = vmatprep.subr.mxu0 %v425
    %1138 = vmatpush1.msra.mxu0 %v424
    %1139 = vmatprep.subr.mxu0 %v429
    %1140 = vmatpush1.msra.mxu0 %v428
    %1141 = vmatprep.subr.mxu0 %v433
    %1142 = vmatpush1.msra.mxu0 %v432
    %1143 = vmatprep.subr.mxu0 0.0
    %1144 = vmatpush1.msra.mxu0 0.0
    %1145 = vmatprep.subr.mxu0 0.0
    %1146 = vmatpush1.msra.mxu0 0.0
    %1147 = vmatprep.subr.mxu0 0.0
    %1148 = vmatpush1.msra.mxu0 0.0
    %1149 = vmatprep.subr.mxu0 0.0
    %1150 = vmatpush1.msra.mxu0 0.0
    %1151 = vmatprep.subr.mxu0 0.0
    %1152 = vmatpush1.msra.mxu0 0.0
    %1153 = vmatprep.subr.mxu0 0.0
    %1154 = vmatpush1.msra.mxu0 0.0
    %1155 = vmatprep.subr.mxu0 0.0
    %1156 = vmatpush1.msra.mxu0 0.0
    %1157 = vmatprep.subr.mxu0 0.0
    %1158 = vmatpush1.msra.mxu0 0.0
    %1159 = vmatprep.subr.mxu0 0.0
    %1160 = vmatpush1.msra.mxu0 0.0
    %1161 = vmatprep.subr.mxu0 0.0
    %1162 = vmatpush1.msra.mxu0 0.0
    %1163 = vmatprep.subr.mxu0 0.0
    %1164 = vmatpush1.msra.mxu0 0.0
    %1165 = vmatprep.subr.mxu0 0.0
    %1166 = vmatpush1.msra.mxu0 0.0
    %1167 = vmatprep.subr.mxu0 0.0
    %1168 = vmatpush1.msra.mxu0 0.0
    %1169 = vmatprep.subr.mxu0 0.0
    %1170 = vmatpush1.msra.mxu0 0.0
    %1171 = vmatprep.subr.mxu0 0.0
    %1172 = vmatpush1.msra.mxu0 0.0
    %1173 = vmatprep.subr.mxu0 0.0
    %1174 = vmatpush1.msra.mxu0 0.0
    %1175 = vmatprep.mubr.f32.mxu0 0.0
    %1176 = vmatmul.mubr.f32.gmra.mrb[0].mxu0 %v1103
    %v1177 = vpop.f32.mrb[0].mxu0
    %v1178 = vadd.f32 %v1107, %v1177
    %v1179 = vpop.f32.mrb[0].mxu0
    %v1180 = vadd.f32 %v1108, %v1179
    %1181 = vdwg.mxu0
    %1182 = vmatprep.subr.mxu0 %v375
    %1183 = vmatpush1.msra.mxu0 %v374
    %1184 = vmatprep.subr.mxu0 %v379
    %1185 = vmatpush1.msra.mxu0 %v378
    %1186 = vmatprep.subr.mxu0 %v383
    %1187 = vmatpush1.msra.mxu0 %v382
    %1188 = vmatprep.subr.mxu0 %v387
    %1189 = vmatpush1.msra.mxu0 %v386
    %1190 = vmatprep.subr.mxu0 %v391
    %1191 = vmatpush1.msra.mxu0 %v390
    %1192 = vmatprep.subr.mxu0 %v395
    %1193 = vmatpush1.msra.mxu0 %v394
    %1194 = vmatprep.subr.mxu0 %v399
    %1195 = vmatpush1.msra.mxu0 %v398
    %1196 = vmatprep.subr.mxu0 %v403
    %1197 = vmatpush1.msra.mxu0 %v402
    %1198 = vmatprep.subr.mxu0 %v407
    %1199 = vmatpush1.msra.mxu0 %v406
    %1200 = vmatprep.subr.mxu0 %v411
    %1201 = vmatpush1.msra.mxu0 %v410
    %1202 = vmatprep.subr.mxu0 %v415
    %1203 = vmatpush1.msra.mxu0 %v414
    %1204 = vmatprep.subr.mxu0 %v419
    %1205 = vmatpush1.msra.mxu0 %v418
    %1206 = vmatprep.subr.mxu0 %v423
    %1207 = vmatpush1.msra.mxu0 %v422
    %1208 = vmatprep.subr.mxu0 %v427
    %1209 = vmatpush1.msra.mxu0 %v426
    %1210 = vmatprep.subr.mxu0 %v431
    %1211 = vmatpush1.msra.mxu0 %v430
    %1212 = vmatprep.subr.mxu0 %v435
    %1213 = vmatpush1.msra.mxu0 %v434
    %1214 = vmatprep.subr.mxu0 0.0
    %1215 = vmatpush1.msra.mxu0 0.0
    %1216 = vmatprep.subr.mxu0 0.0
    %1217 = vmatpush1.msra.mxu0 0.0
    %1218 = vmatprep.subr.mxu0 0.0
    %1219 = vmatpush1.msra.mxu0 0.0
    %1220 = vmatprep.subr.mxu0 0.0
    %1221 = vmatpush1.msra.mxu0 0.0
    %1222 = vmatprep.subr.mxu0 0.0
    %1223 = vmatpush1.msra.mxu0 0.0
    %1224 = vmatprep.subr.mxu0 0.0
    %1225 = vmatpush1.msra.mxu0 0.0
    %1226 = vmatprep.subr.mxu0 0.0
    %1227 = vmatpush1.msra.mxu0 0.0
    %1228 = vmatprep.subr.mxu0 0.0
    %1229 = vmatpush1.msra.mxu0 0.0
    %1230 = vmatprep.subr.mxu0 0.0
    %1231 = vmatpush1.msra.mxu0 0.0
    %1232 = vmatprep.subr.mxu0 0.0
    %1233 = vmatpush1.msra.mxu0 0.0
    %1234 = vmatprep.subr.mxu0 0.0
    %1235 = vmatpush1.msra.mxu0 0.0
    %1236 = vmatprep.subr.mxu0 0.0
    %1237 = vmatpush1.msra.mxu0 0.0
    %1238 = vmatprep.subr.mxu0 0.0
    %1239 = vmatpush1.msra.mxu0 0.0
    %1240 = vmatprep.subr.mxu0 0.0
    %1241 = vmatpush1.msra.mxu0 0.0
    %1242 = vmatprep.subr.mxu0 0.0
    %1243 = vmatpush1.msra.mxu0 0.0
    %1244 = vmatprep.subr.mxu0 0.0
    %1245 = vmatpush1.msra.mxu0 0.0
    %1246 = vmatprep.mubr.f32.mxu0 0.0
    %1247 = vmatmul.mubr.f32.gmra.mrb[0].mxu0 %v1103
    %v1248 = vpop.f32.mrb[0].mxu0
    %v1249 = vadd.f32 %v1109, %v1248
    %v1250 = vpop.f32.mrb[0].mxu0
    %v1251 = vadd.f32 %v1110, %v1250
    %1252 = vdwg.mxu0
    %v1253 = vmul.f32 %v1178, 0.5
    %v1254 = vmul.f32 %v1180, 0.5
    %v1255 = vmul.f32 %v1249, 0.5
    %v1256 = vtanh.pop %v1253
    %v1257 = vtanh.pop %v1254
    %v1258 = vtanh.pop %v1255
    %v1259 = vadd.f32 %v1256, 1.0
    %v1260 = vadd.f32 %v1257, 1.0
    %v1261 = vadd.f32 %v1258, 1.0
    %v1262 = vmul.f32 %v1259, 0.5
    %v1263 = vmul.f32 %v1260, 0.5
    %v1264 = vmul.f32 %v1261, 0.5
    %v1265 = vtanh.pop %v1251
    %v1266 = vmul.f32 %v1263, %v1101
    %v1267 = vmul.f32 %v1262, %v1265
    %v1268 = vadd.f32 %v1266, %v1267
    %v1269 = vtanh.pop %v1268
    %v1270 = vmul.f32 %v1264, %v1269
    %s1271 = smul.u32 5, 4
    %s1272 = smul.addr %s1271, 8
    %s1273 = scalar_lea.vmem [#allocation2], %s1272
    %v1274 = vld [vmem:[%s1273] sm:$0xff]
    %v1275 = vld [vmem:[%s1273 + $0x8] sm:$0xff]
    %v1276 = vld [vmem:[%s1273 + $0x10] sm:$0xff]
    %v1277 = vld [vmem:[%s1273 + $0x18] sm:$0xff]
    %1278 = vmatprep.subr.mxu0 %v373
    %1279 = vmatpush1.msra.mxu0 %v372
    %1280 = vmatprep.subr.mxu0 %v377
    %1281 = vmatpush1.msra.mxu0 %v376
    %1282 = vmatprep.subr.mxu0 %v381
    %1283 = vmatpush1.msra.mxu0 %v380
    %1284 = vmatprep.subr.mxu0 %v385
    %1285 = vmatpush1.msra.mxu0 %v384
    %1286 = vmatprep.subr.mxu0 %v389
    %1287 = vmatpush1.msra.mxu0 %v388
    %1288 = vmatprep.subr.mxu0 %v393
    %1289 = vmatpush1.msra.mxu0 %v392
    %1290 = vmatprep.subr.mxu0 %v397
    %1291 = vmatpush1.msra.mxu0 %v396
    %1292 = vmatprep.subr.mxu0 %v401
    %1293 = vmatpush1.msra.mxu0 %v400
    %1294 = vmatprep.subr.mxu0 %v405
    %1295 = vmatpush1.msra.mxu0 %v404
    %1296 = vmatprep.subr.mxu0 %v409
    %1297 = vmatpush1.msra.mxu0 %v408
    %1298 = vmatprep.subr.mxu0 %v413
    %1299 = vmatpush1.msra.mxu0 %v412
    %1300 = vmatprep.subr.mxu0 %v417
    %1301 = vmatpush1.msra.mxu0 %v416
    %1302 = vmatprep.subr.mxu0 %v421
    %1303 = vmatpush1.msra.mxu0 %v420
    %1304 = vmatprep.subr.mxu0 %v425
    %1305 = vmatpush1.msra.mxu0 %v424
    %1306 = vmatprep.subr.mxu0 %v429
    %1307 = vmatpush1.msra.mxu0 %v428
    %1308 = vmatprep.subr.mxu0 %v433
    %1309 = vmatpush1.msra.mxu0 %v432
    %1310 = vmatprep.subr.mxu0 0.0
    %1311 = vmatpush1.msra.mxu0 0.0
    %1312 = vmatprep.subr.mxu0 0.0
    %1313 = vmatpush1.msra.mxu0 0.0
    %1314 = vmatprep.subr.mxu0 0.0
    %1315 = vmatpush1.msra.mxu0 0.0
    %1316 = vmatprep.subr.mxu0 0.0
    %1317 = vmatpush1.msra.mxu0 0.0
    %1318 = vmatprep.subr.mxu0 0.0
    %1319 = vmatpush1.msra.mxu0 0.0
    %1320 = vmatprep.subr.mxu0 0.0
    %1321 = vmatpush1.msra.mxu0 0.0
    %1322 = vmatprep.subr.mxu0 0.0
    %1323 = vmatpush1.msra.mxu0 0.0
    %1324 = vmatprep.subr.mxu0 0.0
    %1325 = vmatpush1.msra.mxu0 0.0
    %1326 = vmatprep.subr.mxu0 0.0
    %1327 = vmatpush1.msra.mxu0 0.0
    %1328 = vmatprep.subr.mxu0 0.0
    %1329 = vmatpush1.msra.mxu0 0.0
    %1330 = vmatprep.subr.mxu0 0.0
    %1331 = vmatpush1.msra.mxu0 0.0
    %1332 = vmatprep.subr.mxu0 0.0
    %1333 = vmatpush1.msra.mxu0 0.0
    %1334 = vmatprep.subr.mxu0 0.0
    %1335 = vmatpush1.msra.mxu0 0.0
    %1336 = vmatprep.subr.mxu0 0.0
    %1337 = vmatpush1.msra.mxu0 0.0
    %1338 = vmatprep.subr.mxu0 0.0
    %1339 = vmatpush1.msra.mxu0 0.0
    %1340 = vmatprep.subr.mxu0 0.0
    %1341 = vmatpush1.msra.mxu0 0.0
    %1342 = vmatprep.mubr.f32.mxu0 0.0
    %1343 = vmatmul.mubr.f32.gmra.mrb[0].mxu0 %v1270
    %v1344 = vpop.f32.mrb[0].mxu0
    %v1345 = vadd.f32 %v1274, %v1344
    %v1346 = vpop.f32.mrb[0].mxu0
    %v1347 = vadd.f32 %v1275, %v1346
    %1348 = vdwg.mxu0
    %1349 = vmatprep.subr.mxu0 %v375
    %1350 = vmatpush1.msra.mxu0 %v374
    %1351 = vmatprep.subr.mxu0 %v379
    %1352 = vmatpush1.msra.mxu0 %v378
    %1353 = vmatprep.subr.mxu0 %v383
    %1354 = vmatpush1.msra.mxu0 %v382
    %1355 = vmatprep.subr.mxu0 %v387
    %1356 = vmatpush1.msra.mxu0 %v386
    %1357 = vmatprep.subr.mxu0 %v391
    %1358 = vmatpush1.msra.mxu0 %v390
    %1359 = vmatprep.subr.mxu0 %v395
    %1360 = vmatpush1.msra.mxu0 %v394
    %1361 = vmatprep.subr.mxu0 %v399
    %1362 = vmatpush1.msra.mxu0 %v398
    %1363 = vmatprep.subr.mxu0 %v403
    %1364 = vmatpush1.msra.mxu0 %v402
    %1365 = vmatprep.subr.mxu0 %v407
    %1366 = vmatpush1.msra.mxu0 %v406
    %1367 = vmatprep.subr.mxu0 %v411
    %1368 = vmatpush1.msra.mxu0 %v410
    %1369 = vmatprep.subr.mxu0 %v415
    %1370 = vmatpush1.msra.mxu0 %v414
    %1371 = vmatprep.subr.mxu0 %v419
    %1372 = vmatpush1.msra.mxu0 %v418
    %1373 = vmatprep.subr.mxu0 %v423
    %1374 = vmatpush1.msra.mxu0 %v422
    %1375 = vmatprep.subr.mxu0 %v427
    %1376 = vmatpush1.msra.mxu0 %v426
    %1377 = vmatprep.subr.mxu0 %v431
    %1378 = vmatpush1.msra.mxu0 %v430
    %1379 = vmatprep.subr.mxu0 %v435
    %1380 = vmatpush1.msra.mxu0 %v434
    %1381 = vmatprep.subr.mxu0 0.0
    %1382 = vmatpush1.msra.mxu0 0.0
    %1383 = vmatprep.subr.mxu0 0.0
    %1384 = vmatpush1.msra.mxu0 0.0
    %1385 = vmatprep.subr.mxu0 0.0
    %1386 = vmatpush1.msra.mxu0 0.0
    %1387 = vmatprep.subr.mxu0 0.0
    %1388 = vmatpush1.msra.mxu0 0.0
    %1389 = vmatprep.subr.mxu0 0.0
    %1390 = vmatpush1.msra.mxu0 0.0
    %1391 = vmatprep.subr.mxu0 0.0
    %1392 = vmatpush1.msra.mxu0 0.0
    %1393 = vmatprep.subr.mxu0 0.0
    %1394 = vmatpush1.msra.mxu0 0.0
    %1395 = vmatprep.subr.mxu0 0.0
    %1396 = vmatpush1.msra.mxu0 0.0
    %1397 = vmatprep.subr.mxu0 0.0
    %1398 = vmatpush1.msra.mxu0 0.0
    %1399 = vmatprep.subr.mxu0 0.0
    %1400 = vmatpush1.msra.mxu0 0.0
    %1401 = vmatprep.subr.mxu0 0.0
    %1402 = vmatpush1.msra.mxu0 0.0
    %1403 = vmatprep.subr.mxu0 0.0
    %1404 = vmatpush1.msra.mxu0 0.0
    %1405 = vmatprep.subr.mxu0 0.0
    %1406 = vmatpush1.msra.mxu0 0.0
    %1407 = vmatprep.subr.mxu0 0.0
    %1408 = vmatpush1.msra.mxu0 0.0
    %1409 = vmatprep.subr.mxu0 0.0
    %1410 = vmatpush1.msra.mxu0 0.0
    %1411 = vmatprep.subr.mxu0 0.0
    %1412 = vmatpush1.msra.mxu0 0.0
    %1413 = vmatprep.mubr.f32.mxu0 0.0
    %1414 = vmatmul.mubr.f32.gmra.mrb[0].mxu0 %v1270
    %v1415 = vpop.f32.mrb[0].mxu0
    %v1416 = vadd.f32 %v1276, %v1415
    %v1417 = vpop.f32.mrb[0].mxu0
    %v1418 = vadd.f32 %v1277, %v1417
    %1419 = vdwg.mxu0
    %v1420 = vmul.f32 %v1345, 0.5
    %v1421 = vmul.f32 %v1347, 0.5
    %v1422 = vmul.f32 %v1416, 0.5
    %v1423 = vtanh.pop %v1420
    %v1424 = vtanh.pop %v1421
    %v1425 = vtanh.pop %v1422
    %v1426 = vadd.f32 %v1423, 1.0
    %v1427 = vadd.f32 %v1424, 1.0
    %v1428 = vadd.f32 %v1425, 1.0
    %v1429 = vmul.f32 %v1426, 0.5
    %v1430 = vmul.f32 %v1427, 0.5
    %v1431 = vmul.f32 %v1428, 0.5
    %v1432 = vtanh.pop %v1418
    %v1433 = vmul.f32 %v1430, %v1268
    %v1434 = vmul.f32 %v1429, %v1432
    %v1435 = vadd.f32 %v1433, %v1434
    %v1436 = vtanh.pop %v1435
    %v1437 = vmul.f32 %v1431, %v1436
    %s1438 = smul.u32 6, 4
    %s1439 = smul.addr %s1438, 8
    %s1440 = scalar_lea.vmem [#allocation2], %s1439
    %v1441 = vld [vmem:[%s1440] sm:$0xff]
    %v1442 = vld [vmem:[%s1440 + $0x8] sm:$0xff]
    %v1443 = vld [vmem:[%s1440 + $0x10] sm:$0xff]
    %v1444 = vld [vmem:[%s1440 + $0x18] sm:$0xff]
    %1445 = vmatprep.subr.mxu0 %v373
    %1446 = vmatpush1.msra.mxu0 %v372
    %1447 = vmatprep.subr.mxu0 %v377
    %1448 = vmatpush1.msra.mxu0 %v376
    %1449 = vmatprep.subr.mxu0 %v381
    %1450 = vmatpush1.msra.mxu0 %v380
    %1451 = vmatprep.subr.mxu0 %v385
    %1452 = vmatpush1.msra.mxu0 %v384
    %1453 = vmatprep.subr.mxu0 %v389
    %1454 = vmatpush1.msra.mxu0 %v388
    %1455 = vmatprep.subr.mxu0 %v393
    %1456 = vmatpush1.msra.mxu0 %v392
    %1457 = vmatprep.subr.mxu0 %v397
    %1458 = vmatpush1.msra.mxu0 %v396
    %1459 = vmatprep.subr.mxu0 %v401
    %1460 = vmatpush1.msra.mxu0 %v400
    %1461 = vmatprep.subr.mxu0 %v405
    %1462 = vmatpush1.msra.mxu0 %v404
    %1463 = vmatprep.subr.mxu0 %v409
    %1464 = vmatpush1.msra.mxu0 %v408
    %1465 = vmatprep.subr.mxu0 %v413
    %1466 = vmatpush1.msra.mxu0 %v412
    %1467 = vmatprep.subr.mxu0 %v417
    %1468 = vmatpush1.msra.mxu0 %v416
    %1469 = vmatprep.subr.mxu0 %v421
    %1470 = vmatpush1.msra.mxu0 %v420
    %1471 = vmatprep.subr.mxu0 %v425
    %1472 = vmatpush1.msra.mxu0 %v424
    %1473 = vmatprep.subr.mxu0 %v429
    %1474 = vmatpush1.msra.mxu0 %v428
    %1475 = vmatprep.subr.mxu0 %v433
    %1476 = vmatpush1.msra.mxu0 %v432
    %1477 = vmatprep.subr.mxu0 0.0
    %1478 = vmatpush1.msra.mxu0 0.0
    %1479 = vmatprep.subr.mxu0 0.0
    %1480 = vmatpush1.msra.mxu0 0.0
    %1481 = vmatprep.subr.mxu0 0.0
    %1482 = vmatpush1.msra.mxu0 0.0
    %1483 = vmatprep.subr.mxu0 0.0
    %1484 = vmatpush1.msra.mxu0 0.0
    %1485 = vmatprep.subr.mxu0 0.0
    %1486 = vmatpush1.msra.mxu0 0.0
    %1487 = vmatprep.subr.mxu0 0.0
    %1488 = vmatpush1.msra.mxu0 0.0
    %1489 = vmatprep.subr.mxu0 0.0
    %1490 = vmatpush1.msra.mxu0 0.0
    %1491 = vmatprep.subr.mxu0 0.0
    %1492 = vmatpush1.msra.mxu0 0.0
    %1493 = vmatprep.subr.mxu0 0.0
    %1494 = vmatpush1.msra.mxu0 0.0
    %1495 = vmatprep.subr.mxu0 0.0
    %1496 = vmatpush1.msra.mxu0 0.0
    %1497 = vmatprep.subr.mxu0 0.0
    %1498 = vmatpush1.msra.mxu0 0.0
    %1499 = vmatprep.subr.mxu0 0.0
    %1500 = vmatpush1.msra.mxu0 0.0
    %1501 = vmatprep.subr.mxu0 0.0
    %1502 = vmatpush1.msra.mxu0 0.0
    %1503 = vmatprep.subr.mxu0 0.0
    %1504 = vmatpush1.msra.mxu0 0.0
    %1505 = vmatprep.subr.mxu0 0.0
    %1506 = vmatpush1.msra.mxu0 0.0
    %1507 = vmatprep.subr.mxu0 0.0
    %1508 = vmatpush1.msra.mxu0 0.0
    %1509 = vmatprep.mubr.f32.mxu0 0.0
    %1510 = vmatmul.mubr.f32.gmra.mrb[0].mxu0 %v1437
    %v1511 = vpop.f32.mrb[0].mxu0
    %v1512 = vadd.f32 %v1441, %v1511
    %v1513 = vpop.f32.mrb[0].mxu0
    %v1514 = vadd.f32 %v1442, %v1513
    %1515 = vdwg.mxu0
    %1516 = vmatprep.subr.mxu0 %v375
    %1517 = vmatpush1.msra.mxu0 %v374
    %1518 = vmatprep.subr.mxu0 %v379
    %1519 = vmatpush1.msra.mxu0 %v378
    %1520 = vmatprep.subr.mxu0 %v383
    %1521 = vmatpush1.msra.mxu0 %v382
    %1522 = vmatprep.subr.mxu0 %v387
    %1523 = vmatpush1.msra.mxu0 %v386
    %1524 = vmatprep.subr.mxu0 %v391
    %1525 = vmatpush1.msra.mxu0 %v390
    %1526 = vmatprep.subr.mxu0 %v395
    %1527 = vmatpush1.msra.mxu0 %v394
    %1528 = vmatprep.subr.mxu0 %v399
    %1529 = vmatpush1.msra.mxu0 %v398
    %1530 = vmatprep.subr.mxu0 %v403
    %1531 = vmatpush1.msra.mxu0 %v402
    %1532 = vmatprep.subr.mxu0 %v407
    %1533 = vmatpush1.msra.mxu0 %v406
    %1534 = vmatprep.subr.mxu0 %v411
    %1535 = vmatpush1.msra.mxu0 %v410
    %1536 = vmatprep.subr.mxu0 %v415
    %1537 = vmatpush1.msra.mxu0 %v414
    %1538 = vmatprep.subr.mxu0 %v419
    %1539 = vmatpush1.msra.mxu0 %v418
    %1540 = vmatprep.subr.mxu0 %v423
    %1541 = vmatpush1.msra.mxu0 %v422
    %1542 = vmatprep.subr.mxu0 %v427
    %1543 = vmatpush1.msra.mxu0 %v426
    %1544 = vmatprep.subr.mxu0 %v431
    %1545 = vmatpush1.msra.mxu0 %v430
    %1546 = vmatprep.subr.mxu0 %v435
    %1547 = vmatpush1.msra.mxu0 %v434
    %1548 = vmatprep.subr.mxu0 0.0
    %1549 = vmatpush1.msra.mxu0 0.0
    %1550 = vmatprep.subr.mxu0 0.0
    %1551 = vmatpush1.msra.mxu0 0.0
    %1552 = vmatprep.subr.mxu0 0.0
    %1553 = vmatpush1.msra.mxu0 0.0
    %1554 = vmatprep.subr.mxu0 0.0
    %1555 = vmatpush1.msra.mxu0 0.0
    %1556 = vmatprep.subr.mxu0 0.0
    %1557 = vmatpush1.msra.mxu0 0.0
    %1558 = vmatprep.subr.mxu0 0.0
    %1559 = vmatpush1.msra.mxu0 0.0
    %1560 = vmatprep.subr.mxu0 0.0
    %1561 = vmatpush1.msra.mxu0 0.0
    %1562 = vmatprep.subr.mxu0 0.0
    %1563 = vmatpush1.msra.mxu0 0.0
    %1564 = vmatprep.subr.mxu0 0.0
    %1565 = vmatpush1.msra.mxu0 0.0
    %1566 = vmatprep.subr.mxu0 0.0
    %1567 = vmatpush1.msra.mxu0 0.0
    %1568 = vmatprep.subr.mxu0 0.0
    %1569 = vmatpush1.msra.mxu0 0.0
    %1570 = vmatprep.subr.mxu0 0.0
    %1571 = vmatpush1.msra.mxu0 0.0
    %1572 = vmatprep.subr.mxu0 0.0
    %1573 = vmatpush1.msra.mxu0 0.0
    %1574 = vmatprep.subr.mxu0 0.0
    %1575 = vmatpush1.msra.mxu0 0.0
    %1576 = vmatprep.subr.mxu0 0.0
    %1577 = vmatpush1.msra.mxu0 0.0
    %1578 = vmatprep.subr.mxu0 0.0
    %1579 = vmatpush1.msra.mxu0 0.0
    %1580 = vmatprep.mubr.f32.mxu0 0.0
    %1581 = vmatmul.mubr.f32.gmra.mrb[0].mxu0 %v1437
    %v1582 = vpop.f32.mrb[0].mxu0
    %v1583 = vadd.f32 %v1443, %v1582
    %v1584 = vpop.f32.mrb[0].mxu0
    %v1585 = vadd.f32 %v1444, %v1584
    %1586 = vdwg.mxu0
    %v1587 = vmul.f32 %v1512, 0.5
    %v1588 = vmul.f32 %v1514, 0.5
    %v1589 = vmul.f32 %v1583, 0.5
    %v1590 = vtanh.pop %v1587
    %v1591 = vtanh.pop %v1588
    %v1592 = vtanh.pop %v1589
    %v1593 = vadd.f32 %v1590, 1.0
    %v1594 = vadd.f32 %v1591, 1.0
    %v1595 = vadd.f32 %v1592, 1.0
    %v1596 = vmul.f32 %v1593, 0.5
    %v1597 = vmul.f32 %v1594, 0.5
    %v1598 = vmul.f32 %v1595, 0.5
    %v1599 = vtanh.pop %v1585
    %v1600 = vmul.f32 %v1597, %v1435
    %v1601 = vmul.f32 %v1596, %v1599
    %v1602 = vadd.f32 %v1600, %v1601
    %v1603 = vtanh.pop %v1602
    %v1604 = vmul.f32 %v1598, %v1603
    %s1605 = smul.u32 7, 4
    %s1606 = smul.addr %s1605, 8
    %s1607 = scalar_lea.vmem [#allocation2], %s1606
    %v1608 = vld [vmem:[%s1607] sm:$0xff]
    %v1609 = vld [vmem:[%s1607 + $0x8] sm:$0xff]
    %v1610 = vld [vmem:[%s1607 + $0x10] sm:$0xff]
    %v1611 = vld [vmem:[%s1607 + $0x18] sm:$0xff]
    %1612 = vmatprep.subr.mxu0 %v373
    %1613 = vmatpush1.msra.mxu0 %v372
    %1614 = vmatprep.subr.mxu0 %v377
    %1615 = vmatpush1.msra.mxu0 %v376
    %1616 = vmatprep.subr.mxu0 %v381
    %1617 = vmatpush1.msra.mxu0 %v380
    %1618 = vmatprep.subr.mxu0 %v385
    %1619 = vmatpush1.msra.mxu0 %v384
    %1620 = vmatprep.subr.mxu0 %v389
    %1621 = vmatpush1.msra.mxu0 %v388
    %1622 = vmatprep.subr.mxu0 %v393
    %1623 = vmatpush1.msra.mxu0 %v392
    %1624 = vmatprep.subr.mxu0 %v397
    %1625 = vmatpush1.msra.mxu0 %v396
    %1626 = vmatprep.subr.mxu0 %v401
    %1627 = vmatpush1.msra.mxu0 %v400
    %1628 = vmatprep.subr.mxu0 %v405
    %1629 = vmatpush1.msra.mxu0 %v404
    %1630 = vmatprep.subr.mxu0 %v409
    %1631 = vmatpush1.msra.mxu0 %v408
    %1632 = vmatprep.subr.mxu0 %v413
    %1633 = vmatpush1.msra.mxu0 %v412
    %1634 = vmatprep.subr.mxu0 %v417
    %1635 = vmatpush1.msra.mxu0 %v416
    %1636 = vmatprep.subr.mxu0 %v421
    %1637 = vmatpush1.msra.mxu0 %v420
    %1638 = vmatprep.subr.mxu0 %v425
    %1639 = vmatpush1.msra.mxu0 %v424
    %1640 = vmatprep.subr.mxu0 %v429
    %1641 = vmatpush1.msra.mxu0 %v428
    %1642 = vmatprep.subr.mxu0 %v433
    %1643 = vmatpush1.msra.mxu0 %v432
    %1644 = vmatprep.subr.mxu0 0.0
    %1645 = vmatpush1.msra.mxu0 0.0
    %1646 = vmatprep.subr.mxu0 0.0
    %1647 = vmatpush1.msra.mxu0 0.0
    %1648 = vmatprep.subr.mxu0 0.0
    %1649 = vmatpush1.msra.mxu0 0.0
    %1650 = vmatprep.subr.mxu0 0.0
    %1651 = vmatpush1.msra.mxu0 0.0
    %1652 = vmatprep.subr.mxu0 0.0
    %1653 = vmatpush1.msra.mxu0 0.0
    %1654 = vmatprep.subr.mxu0 0.0
    %1655 = vmatpush1.msra.mxu0 0.0
    %1656 = vmatprep.subr.mxu0 0.0
    %1657 = vmatpush1.msra.mxu0 0.0
    %1658 = vmatprep.subr.mxu0 0.0
    %1659 = vmatpush1.msra.mxu0 0.0
    %1660 = vmatprep.subr.mxu0 0.0
    %1661 = vmatpush1.msra.mxu0 0.0
    %1662 = vmatprep.subr.mxu0 0.0
    %1663 = vmatpush1.msra.mxu0 0.0
    %1664 = vmatprep.subr.mxu0 0.0
    %1665 = vmatpush1.msra.mxu0 0.0
    %1666 = vmatprep.subr.mxu0 0.0
    %1667 = vmatpush1.msra.mxu0 0.0
    %1668 = vmatprep.subr.mxu0 0.0
    %1669 = vmatpush1.msra.mxu0 0.0
    %1670 = vmatprep.subr.mxu0 0.0
    %1671 = vmatpush1.msra.mxu0 0.0
    %1672 = vmatprep.subr.mxu0 0.0
    %1673 = vmatpush1.msra.mxu0 0.0
    %1674 = vmatprep.subr.mxu0 0.0
    %1675 = vmatpush1.msra.mxu0 0.0
    %1676 = vmatprep.mubr.f32.mxu0 0.0
    %1677 = vmatmul.mubr.f32.gmra.mrb[0].mxu0 %v1604
    %v1678 = vpop.f32.mrb[0].mxu0
    %v1679 = vadd.f32 %v1608, %v1678
    %v1680 = vpop.f32.mrb[0].mxu0
    %v1681 = vadd.f32 %v1609, %v1680
    %1682 = vdwg.mxu0
    %1683 = vmatprep.subr.mxu0 %v375
    %1684 = vmatpush1.msra.mxu0 %v374
    %1685 = vmatprep.subr.mxu0 %v379
    %1686 = vmatpush1.msra.mxu0 %v378
    %1687 = vmatprep.subr.mxu0 %v383
    %1688 = vmatpush1.msra.mxu0 %v382
    %1689 = vmatprep.subr.mxu0 %v387
    %1690 = vmatpush1.msra.mxu0 %v386
    %1691 = vmatprep.subr.mxu0 %v391
    %1692 = vmatpush1.msra.mxu0 %v390
    %1693 = vmatprep.subr.mxu0 %v395
    %1694 = vmatpush1.msra.mxu0 %v394
    %1695 = vmatprep.subr.mxu0 %v399
    %1696 = vmatpush1.msra.mxu0 %v398
    %1697 = vmatprep.subr.mxu0 %v403
    %1698 = vmatpush1.msra.mxu0 %v402
    %1699 = vmatprep.subr.mxu0 %v407
    %1700 = vmatpush1.msra.mxu0 %v406
    %1701 = vmatprep.subr.mxu0 %v411
    %1702 = vmatpush1.msra.mxu0 %v410
    %1703 = vmatprep.subr.mxu0 %v415
    %1704 = vmatpush1.msra.mxu0 %v414
    %1705 = vmatprep.subr.mxu0 %v419
    %1706 = vmatpush1.msra.mxu0 %v418
    %1707 = vmatprep.subr.mxu0 %v423
    %1708 = vmatpush1.msra.mxu0 %v422
    %1709 = vmatprep.subr.mxu0 %v427
    %1710 = vmatpush1.msra.mxu0 %v426
    %1711 = vmatprep.subr.mxu0 %v431
    %1712 = vmatpush1.msra.mxu0 %v430
    %1713 = vmatprep.subr.mxu0 %v435
    %1714 = vmatpush1.msra.mxu0 %v434
    %1715 = vmatprep.subr.mxu0 0.0
    %1716 = vmatpush1.msra.mxu0 0.0
    %1717 = vmatprep.subr.mxu0 0.0
    %1718 = vmatpush1.msra.mxu0 0.0
    %1719 = vmatprep.subr.mxu0 0.0
    %1720 = vmatpush1.msra.mxu0 0.0
    %1721 = vmatprep.subr.mxu0 0.0
    %1722 = vmatpush1.msra.mxu0 0.0
    %1723 = vmatprep.subr.mxu0 0.0
    %1724 = vmatpush1.msra.mxu0 0.0
    %1725 = vmatprep.subr.mxu0 0.0
    %1726 = vmatpush1.msra.mxu0 0.0
    %1727 = vmatprep.subr.mxu0 0.0
    %1728 = vmatpush1.msra.mxu0 0.0
    %1729 = vmatprep.subr.mxu0 0.0
    %1730 = vmatpush1.msra.mxu0 0.0
    %1731 = vmatprep.subr.mxu0 0.0
    %1732 = vmatpush1.msra.mxu0 0.0
    %1733 = vmatprep.subr.mxu0 0.0
    %1734 = vmatpush1.msra.mxu0 0.0
    %1735 = vmatprep.subr.mxu0 0.0
    %1736 = vmatpush1.msra.mxu0 0.0
    %1737 = vmatprep.subr.mxu0 0.0
    %1738 = vmatpush1.msra.mxu0 0.0
    %1739 = vmatprep.subr.mxu0 0.0
    %1740 = vmatpush1.msra.mxu0 0.0
    %1741 = vmatprep.subr.mxu0 0.0
    %1742 = vmatpush1.msra.mxu0 0.0
    %1743 = vmatprep.subr.mxu0 0.0
    %1744 = vmatpush1.msra.mxu0 0.0
    %1745 = vmatprep.subr.mxu0 0.0
    %1746 = vmatpush1.msra.mxu0 0.0
    %1747 = vmatprep.mubr.f32.mxu0 0.0
    %1748 = vmatmul.mubr.f32.gmra.mrb[0].mxu0 %v1604
    %v1749 = vpop.f32.mrb[0].mxu0
    %v1750 = vadd.f32 %v1610, %v1749
    %v1751 = vpop.f32.mrb[0].mxu0
    %v1752 = vadd.f32 %v1611, %v1751
    %1753 = vdwg.mxu0
    %v1754 = vmul.f32 %v1679, 0.5
    %v1755 = vmul.f32 %v1681, 0.5
    %v1756 = vmul.f32 %v1750, 0.5
    %v1757 = vtanh.pop %v1754
    %v1758 = vtanh.pop %v1755
    %v1759 = vtanh.pop %v1756
    %v1760 = vadd.f32 %v1757, 1.0
    %v1761 = vadd.f32 %v1758, 1.0
    %v1762 = vadd.f32 %v1759, 1.0
    %v1763 = vmul.f32 %v1760, 0.5
    %v1764 = vmul.f32 %v1761, 0.5
    %v1765 = vmul.f32 %v1762, 0.5
    %v1766 = vtanh.pop %v1752
    %v1767 = vmul.f32 %v1764, %v1602
    %v1768 = vmul.f32 %v1763, %v1766
    %v1769 = vadd.f32 %v1767, %v1768
    %v1770 = vtanh.pop %v1769
    %v1771 = vmul.f32 %v1765, %v1770
    %v1772 = vmax.f32 %v1771, 0.0
    %v1773 = vld [vmem:[%s4] sm:$0x1]
    %v1775 = vlaneseq
    %v1776 = vshrl.u32 %v1775, 7
    %v1777 = vsub.s32 0, %v1776
    %v1778 = vrot.slane %v1773, %v1777
    %v1780 = vmul.f32 %v1772, %v1778
    %1781 = vadd.xlane.f32.xlu0 %v1780
    %v1782 = vpop.xlane.xlu0 %1781
    %v1783 = vld [vmem:[%s5] sm:$0x1]
    %v1785 = vlaneseq
    %v1786 = vshrl.u32 %v1785, 7
    %v1787 = vsub.s32 0, %v1786
    %v1788 = vrot.slane %v1783, %v1787
    %v1790 = vadd.f32 %v1782, %v1788
    %vm1791 = vcmask 146432
    %1792 = vst.msk [vmem:[#allocation6] sm:$0xff] %vm1791, %v1790
    // Predicated region
    $region30: #{rl_forward_all_actions.1} parent=1 // pred_check
      _
    $region31: #{rl_forward_all_actions.1} parent=1 // pred_check_branch
      %1794 = sbr.rel (0) target = $region33
    $region32: #{rl_forward_all_actions.1} parent=1 // pred_region
      %s1796 = ssub.s32 128, 128
      %1797 = vsyncadd [#allocation5], %s1796
      %s1799 = sshll.u32 [#allocation6], 4
      %s1800 = int_to_ptr.vmem [resolvable:$true] %s1799
      %1802 = dma.vmem_to_hbm [thread:$0]  %s1800, 128, %s6, [#allocation5]
    $region33: #{rl_forward_all_actions.1} parent=1 // pred_fallthru
      _
    // Predicated region
    $region34: #{rl_forward_all_actions.1} parent=1 // pred_check
      _
    $region35: #{rl_forward_all_actions.1} parent=1 // pred_check_branch
      %1804 = sbr.rel (0) target = $region37
    $region36: #{rl_forward_all_actions.1} parent=1 // pred_region
      %1805 = dma.done [#allocation5], 128
    $region37: #{rl_forward_all_actions.1} parent=1 // pred_fallthru
      _
    %1806 = vsyncpa [#allocation4], 1
    %1807 = vsyncpa [#allocation5], 1

</llo_original>
